<compile_context>
chip_gen: v6e
topology: v6e:2x2x1
jax: 0.10.0
libtpu: 0.0.40
codegen_flags: <defaults>
</compile_context>

<pallas_src>
import functools

import jax
import jax.numpy as jnp
from jax import lax
from jax.experimental import pallas as pl
from jax.experimental.pallas import tpu as pltpu

_LANES = 128
_SUBLANES = 8


def _round_up(n, m):
    return (n + m - 1) // m * m


def _pad_to(a, shape):
    pads = tuple((0, t - s) for s, t in zip(a.shape, shape))
    if all(p == (0, 0) for p in pads):
        return a
    return jnp.pad(a, pads)


def _layer_norm_f32(h, w, b, eps=1e-5):
    """Plain f32 LayerNorm (pure-JAX reference). PyTorch: biased variance, eps=1e-5."""
    mean = jnp.mean(h, axis=-1, keepdims=True)
    cent = h - mean
    var = jnp.mean(cent * cent, axis=-1, keepdims=True)
    return cent * lax.rsqrt(var + eps) * w + b


def _resnet_kernel(n_blocks, d_block_true, unroll,
                   x_ref, wp_ref, bp_ref,
                   lnw_ref, lnb_ref, w1_ref, b1_ref, w2_ref, b2_ref,
                   prew_ref, preb_ref, wo_ref, bo_ref,
                   o_ref):
    f32 = jnp.float32
    cdt = wp_ref.dtype            # matmul-operand (compute) dtype, e.g. bf16
    d_pad = wp_ref.shape[-1]      # lane-padded d_block

    # Column-validity mask so LayerNorm statistics ignore the lane padding. Padded columns
    # of h are exactly zero throughout (weights/biases padded with zeros), so plain sums are
    # already correct; the mask only keeps the variance from seeing the (0 - mean) terms.
    col = lax.broadcasted_iota(jnp.int32, (1, d_pad), 1)
    ln_mask = (col < d_block_true).astype(f32)
    inv_d = 1.0 / float(d_block_true)

    def layer_norm(h, w, b, eps=1e-5):
        mean = jnp.sum(h, axis=-1, keepdims=True) * inv_d
        cent = (h - mean) * ln_mask
        var = jnp.sum(cent * cent, axis=-1, keepdims=True) * inv_d
        return cent * lax.rsqrt(var + eps) * w + b

    # proj: (bt, d_in) @ (d_in, d_block_pad) — bf16 operands, f32 accumulation on the MXU.
    h = jnp.dot(x_ref[...].astype(cdt), wp_ref[...],
                preferred_element_type=f32) + bp_ref[...]

    def block_step(h, lnw, lnb, w1, b1, w2, b2):
        z = layer_norm(h, lnw, lnb)
        z = jnp.dot(z.astype(cdt), w1, preferred_element_type=f32) + b1
        z = jnp.maximum(z, 0.0)              # ReLU
        # TODO(synk): nn.Dropout omitted — forward implemented in eval mode (identity).
        z = jnp.dot(z.astype(cdt), w2, preferred_element_type=f32) + b2
        return h + z

    if unroll:
        for k in range(n_blocks):
            h = block_step(h, lnw_ref[k], lnb_ref[k], w1_ref[k], b1_ref[k],
                           w2_ref[k], b2_ref[k])
    else:
        # Bounded live ranges + small code size for deep models.
        def body(k, h):
            return block_step(h, lnw_ref[k], lnb_ref[k], w1_ref[k], b1_ref[k],
                              w2_ref[k], b2_ref[k])
        h = lax.fori_loop(0, n_blocks, body, h)

    # preoutput: LayerNorm + ReLU
    h = jnp.maximum(layer_norm(h, prew_ref[...], preb_ref[...]), 0.0)

    # output with residual, exactly as the reference module: x = x + self.output(x)
    out = h + jnp.dot(h.astype(cdt), wo_ref[...], preferred_element_type=f32) + bo_ref[...]
    o_ref[...] = out.astype(o_ref.dtype)


def resnet_forward(x, params, *, block_rows=256, weights_dtype=jnp.bfloat16):
    """x: (B, d_in) float32. params: dict from init_resnet_params. Returns (B, d_out) f32."""
    wp, bp = params["proj_w"], params["proj_b"]
    lnw, lnb = params["ln_w"], params["ln_b"]
    w1, b1 = params["w1"], params["b1"]
    w2, b2 = params["w2"], params["b2"]
    prew, preb = params["pre_w"], params["pre_b"]
    wo, bo = params["out_w"], params["out_b"]

    B, d_in = x.shape
    n_blocks, d_block, d_hidden = w1.shape
    d_out = wo.shape[1]
    assert wp.shape == (d_in, d_block)
    assert d_out == d_block, "output residual (x + output(x)) requires d_out == d_block"
    # TODO(synk): d_in=None / d_out=None module variants (skip proj / skip output) not wired.

    # ---- one-time weight prep: lane-dense (mult-of-128) feature dims + bf16 matmul weights.
    dbp = _round_up(d_block, _LANES)
    dhp = _round_up(d_hidden, _LANES)
    dop = _round_up(d_out, _LANES)

    wdt = jnp.dtype(weights_dtype)
    f32 = jnp.float32
    wp_p = _pad_to(wp, (d_in, dbp)).astype(wdt)
    bp_p = _pad_to(bp, (1, dbp)).astype(f32)
    lnw_p = _pad_to(lnw, (n_blocks, 1, dbp)).astype(f32)
    lnb_p = _pad_to(lnb, (n_blocks, 1, dbp)).astype(f32)
    w1_p = _pad_to(w1, (n_blocks, dbp, dhp)).astype(wdt)
    b1_p = _pad_to(b1, (n_blocks, 1, dhp)).astype(f32)
    w2_p = _pad_to(w2, (n_blocks, dhp, dbp)).astype(wdt)
    b2_p = _pad_to(b2, (n_blocks, 1, dbp)).astype(f32)
    prew_p = _pad_to(prew, (1, dbp)).astype(f32)
    preb_p = _pad_to(preb, (1, dbp)).astype(f32)
    wo_p = _pad_to(wo, (dbp, dop)).astype(wdt)
    bo_p = _pad_to(bo, (1, dop)).astype(f32)

    weight_args = (wp_p, bp_p, lnw_p, lnb_p, w1_p, b1_p, w2_p, b2_p,
                   prew_p, preb_p, wo_p, bo_p)

    # ---- balanced batch tiles; keep >=2 (>=4) tiles for large B so the "parallel" batch
    # axis can actually be sharded across both v7x TensorCores.
    n_tiles = pl.cdiv(B, block_rows)
    if B >= 1024:
        n_tiles = max(n_tiles, 4)
    elif B >= 128:
        n_tiles = max(n_tiles, 2)
    bt = _round_up(pl.cdiv(B, n_tiles), _SUBLANES)
    grid = (pl.cdiv(B, bt),)

    unroll = n_blocks <= 4
    kernel = functools.partial(_resnet_kernel, n_blocks, d_block, unroll)

    flops = 2 * B * (d_in * dbp + n_blocks * (dbp * dhp + dhp * dbp) + dbp * dop)
    weight_bytes = int(sum(int(a.size) * a.dtype.itemsize for a in weight_args))
    cost = pl.CostEstimate(
        flops=int(flops),
        transcendentals=int(B * (n_blocks + 1)),        # one rsqrt per row per LayerNorm
        bytes_accessed=int(4 * B * (d_in + dop) + weight_bytes),
    )

    out_shape = jax.ShapeDtypeStruct((B, dop), f32)
    x_spec = pl.BlockSpec((bt, d_in), lambda i: (i, 0))
    out_spec = pl.BlockSpec((bt, dop), lambda i: (i, 0))

    def build(single_buffer_weights):
        def resident(arr):
            nd = arr.ndim
            idx = lambda i: (0,) * nd
            if single_buffer_weights:
                # Constant index_map => never re-DMA'd; one buffer suffices (halves the
                # resident-weight VMEM footprint — matters most on v7x's 64 MiB VMEM).
                return pl.BlockSpec(arr.shape, idx, pipeline_mode=pl.Buffered(1))
            return pl.BlockSpec(arr.shape, idx)

        # VMEM budget: resident weights (x buffering) + double-buffered x/out tiles +
        # slack for in-flight f32 intermediates, clamped to a generation-aware cap.
        weight_buf = 1 if single_buffer_weights else 2
        needed = (weight_buf * weight_bytes
                  + 2 * bt * (d_in + dop) * 4
                  + 8 * bt * max(dbp, dhp) * 4
                  + (4 << 20))
        try:
            cap = int(pltpu.get_tpu_info().vmem_capacity_bytes) * 3 // 4
        except Exception:
            cap = 48 << 20          # safe on v5e/v6e (128 MiB physical) and v7x (64 MiB)
        vmem_limit = int(min(max(needed, 32 << 20), max(cap, 32 << 20)))

        return pl.pallas_call(
            kernel,
            out_shape=out_shape,
            grid_spec=pl.GridSpec(
                grid=grid,
                in_specs=[x_spec] + [resident(a) for a in weight_args],
                out_specs=out_spec,
            ),
            compiler_params=pltpu.CompilerParams(
                dimension_semantics=("parallel",),   # batch tiles independent (v7x dual-TC)
                vmem_limit_bytes=vmem_limit,
            ),
            cost_estimate=cost,
        )

    # TODO(synk): if n_blocks*d_block*d_hidden weights exceed ~40 MiB (v7x), stream per-block
    # weights with a manual double-buffered DMA instead of keeping them all VMEM-resident.
    try:
        out = build(True)(x, *weight_args)
    except Exception:
        # Fallback for runtimes that reject single-buffered (pl.Buffered(1)) inputs.
        out = build(False)(x, *weight_args)

    return out if dop == d_out else out[:, :d_out]


def init_resnet_params(key, *, d_in, d_block, d_hidden, d_out, n_blocks,
                       dtype=jnp.float32):
    """Deterministic params. Linear weights stored (in, out); biases stored 2-D."""
    ks = jax.random.split(key, 10)

    def lin(k, fan_in, shape):
        bound = 1.0 / (fan_in ** 0.5)
        return jax.random.uniform(k, shape, dtype=dtype, minval=-bound, maxval=bound)

    # Slightly perturbed affine LayerNorm params so the affine path is exercised.
    ln_w = (1.0 + 0.1 * jax.random.normal(ks[8], (n_blocks, 1, d_block))).astype(dtype)
    ln_b = (0.1 * jax.random.normal(ks[9], (n_blocks, 1, d_block))).astype(dtype)
    pre_w = (1.0 + 0.1 * jax.random.normal(ks[6], (1, d_block))).astype(dtype)
    pre_b = (0.1 * jax.random.normal(ks[7], (1, d_block))).astype(dtype)

    return {
        "proj_w": lin(ks[0], d_in, (d_in, d_block)),
        "proj_b": lin(ks[1], d_in, (1, d_block)),
        "ln_w": ln_w,
        "ln_b": ln_b,
        "w1": lin(ks[2], d_block, (n_blocks, d_block, d_hidden)),
        "b1": lin(ks[2], d_block, (n_blocks, 1, d_hidden)),
        "w2": lin(ks[3], d_hidden, (n_blocks, d_hidden, d_block)),
        "b2": lin(ks[3], d_hidden, (n_blocks, 1, d_block)),
        "pre_w": pre_w,
        "pre_b": pre_b,
        "out_w": lin(ks[4], d_block, (d_block, d_out)),
        "out_b": lin(ks[5], d_block, (1, d_out)),
    }


def resnet_reference(x, params, matmul_dtype=None):
    """Pure-JAX reference matching the PyTorch forward (eval mode).

    matmul_dtype=None -> full f32 (PyTorch numerics).
    matmul_dtype=jnp.bfloat16 -> models the kernel's mixed-precision matmul policy.
    """
    def mm(a, w):
        if matmul_dtype is not None:
            a = a.astype(matmul_dtype)
            w = w.astype(matmul_dtype)
        return jnp.dot(a, w, preferred_element_type=jnp.float32)

    h = mm(x, params["proj_w"]) + params["proj_b"]
    n_blocks = params["w1"].shape[0]
    for k in range(n_blocks):
        z = _layer_norm_f32(h, params["ln_w"][k], params["ln_b"][k])
        z = jnp.maximum(mm(z, params["w1"][k]) + params["b1"][k], 0.0)
        z = mm(z, params["w2"][k]) + params["b2"][k]
        h = h + z
    h = jnp.maximum(_layer_norm_f32(h, params["pre_w"], params["pre_b"]), 0.0)
    return h + mm(h, params["out_w"]) + params["out_b"]


if __name__ == "__main__":
    key = jax.random.PRNGKey(0)
    kx, kp = jax.random.split(key)

    # Small config consistent with the module:
    # d_in=16, d_block=32, d_hidden_multiplier=2 -> d_hidden=64, n_blocks=2, d_out=d_block.
    B, d_in, d_block, d_hidden, d_out, n_blocks = 8, 16, 32, 64, 32, 2

    x = jax.random.normal(kx, (B, d_in), dtype=jnp.float32)
    params = init_resnet_params(kp, d_in=d_in, d_block=d_block, d_hidden=d_hidden,
                                d_out=d_out, n_blocks=n_blocks)

    out = resnet_forward(x, params)
    out = jax.block_until_ready(out)
    assert out.shape == (B, d_out)

    # Tight check against a reference using the same mixed-precision matmul policy.
    ref_mixed = resnet_reference(x, params, matmul_dtype=jnp.bfloat16)
    err_mixed = float(jnp.max(jnp.abs(out - ref_mixed)))
    assert jnp.allclose(out, ref_mixed, atol=5e-3, rtol=5e-3), err_mixed

    # Looser sanity check against the full-f32 PyTorch-equivalent reference.
    ref_full = resnet_reference(x, params)
    err_full = float(jnp.max(jnp.abs(out - ref_full)))
    assert jnp.allclose(out, ref_full, atol=5e-2, rtol=5e-2), err_full

    print("KERNEL_OK")
</pallas_src>

<mosaic_0001>
module attributes {stable_mosaic.version = 11 : i64} {
  func.func @_resnet_kernel(%arg0: i32, %arg1: memref<8x16xf32, #tpu.memory_space<vmem>>, %arg2: memref<16x128xbf16, #tpu.memory_space<vmem>>, %arg3: memref<1x128xf32, #tpu.memory_space<vmem>>, %arg4: memref<2x1x128xf32, #tpu.memory_space<vmem>>, %arg5: memref<2x1x128xf32, #tpu.memory_space<vmem>>, %arg6: memref<2x128x128xbf16, #tpu.memory_space<vmem>>, %arg7: memref<2x1x128xf32, #tpu.memory_space<vmem>>, %arg8: memref<2x128x128xbf16, #tpu.memory_space<vmem>>, %arg9: memref<2x1x128xf32, #tpu.memory_space<vmem>>, %arg10: memref<1x128xf32, #tpu.memory_space<vmem>>, %arg11: memref<1x128xf32, #tpu.memory_space<vmem>>, %arg12: memref<128x128xbf16, #tpu.memory_space<vmem>>, %arg13: memref<1x128xf32, #tpu.memory_space<vmem>>, %arg14: memref<8x128xf32, #tpu.memory_space<vmem>>) attributes {dimension_semantics = [#tpu.dimension_semantics<parallel>], iteration_bounds = array<i64: 1>, scalar_prefetch = 0 : i64, scratch_operands = 0 : i64, tpu.core_type = #tpu.core_type<tc>, window_params = [{transform_indices = @transform_0, window_bounds = array<i64: 8, 16>}, {pipeline_mode = #tpu.pipeline_mode<synchronous>, transform_indices = @transform_1, window_bounds = array<i64: 16, 128>}, {pipeline_mode = #tpu.pipeline_mode<synchronous>, transform_indices = @transform_2, window_bounds = array<i64: 1, 128>}, {pipeline_mode = #tpu.pipeline_mode<synchronous>, transform_indices = @transform_3, window_bounds = array<i64: 2, 1, 128>}, {pipeline_mode = #tpu.pipeline_mode<synchronous>, transform_indices = @transform_4, window_bounds = array<i64: 2, 1, 128>}, {pipeline_mode = #tpu.pipeline_mode<synchronous>, transform_indices = @transform_5, window_bounds = array<i64: 2, 128, 128>}, {pipeline_mode = #tpu.pipeline_mode<synchronous>, transform_indices = @transform_6, window_bounds = array<i64: 2, 1, 128>}, {pipeline_mode = #tpu.pipeline_mode<synchronous>, transform_indices = @transform_7, window_bounds = array<i64: 2, 128, 128>}, {pipeline_mode = #tpu.pipeline_mode<synchronous>, transform_indices = @transform_8, window_bounds = array<i64: 2, 1, 128>}, {pipeline_mode = #tpu.pipeline_mode<synchronous>, transform_indices = @transform_9, window_bounds = array<i64: 1, 128>}, {pipeline_mode = #tpu.pipeline_mode<synchronous>, transform_indices = @transform_10, window_bounds = array<i64: 1, 128>}, {pipeline_mode = #tpu.pipeline_mode<synchronous>, transform_indices = @transform_11, window_bounds = array<i64: 128, 128>}, {pipeline_mode = #tpu.pipeline_mode<synchronous>, transform_indices = @transform_12, window_bounds = array<i64: 1, 128>}, {transform_indices = @transform_13, window_bounds = array<i64: 8, 128>}]} {
    %0 = tpu.iota {dimensions = array<i32: 1>} : vector<1x128xi32>
    %c32_i32 = arith.constant 32 : i32
    %1 = vector.broadcast %c32_i32 : i32 to vector<1x128xi32>
    %2 = arith.cmpi slt, %0, %1 : vector<1x128xi32>
    %3 = arith.extui %2 : vector<1x128xi1> to vector<1x128xi32>
    %4 = arith.sitofp %3 : vector<1x128xi32> to vector<1x128xf32>
    %c0 = arith.constant 0 : index
    %c0_0 = arith.constant 0 : index
    %5 = vector.load %arg1[%c0, %c0_0] : memref<8x16xf32, #tpu.memory_space<vmem>>, vector<8x16xf32>
    %6 = arith.truncf %5 : vector<8x16xf32> to vector<8x16xbf16>
    %c0_1 = arith.constant 0 : index
    %c0_2 = arith.constant 0 : index
    %7 = vector.load %arg2[%c0_1, %c0_2] : memref<16x128xbf16, #tpu.memory_space<vmem>>, vector<16x128xbf16>
    %cst = arith.constant dense<0.000000e+00> : vector<8x128xf32>
    %8 = tpu.matmul %6, %7, %cst {dimension_numbers = #tpu.dot_dimension_numbers<[1], [0], [0], [1], [0, 0, 1, 1], [], []>} : vector<8x16xbf16>, vector<16x128xbf16>, vector<8x128xf32> -> vector<8x128xf32>
    %c0_3 = arith.constant 0 : index
    %c0_4 = arith.constant 0 : index
    %9 = vector.load %arg3[%c0_3, %c0_4] : memref<1x128xf32, #tpu.memory_space<vmem>>, vector<1x128xf32>
    %10 = vector.broadcast %9 : vector<1x128xf32> to vector<8x128xf32>
    %11 = arith.addf %8, %10 : vector<8x128xf32>
    %c0_5 = arith.constant 0 : index
    %c0_6 = arith.constant 0 : index
    %c0_7 = arith.constant 0 : index
    %12 = vector.load %arg4[%c0_5, %c0_6, %c0_7] : memref<2x1x128xf32, #tpu.memory_space<vmem>>, vector<1x1x128xf32>
    %13 = vector.shape_cast %12 : vector<1x1x128xf32> to vector<1x128xf32>
    %c0_8 = arith.constant 0 : index
    %c0_9 = arith.constant 0 : index
    %c0_10 = arith.constant 0 : index
    %14 = vector.load %arg5[%c0_8, %c0_9, %c0_10] : memref<2x1x128xf32, #tpu.memory_space<vmem>>, vector<1x1x128xf32>
    %15 = vector.shape_cast %14 : vector<1x1x128xf32> to vector<1x128xf32>
    %c0_11 = arith.constant 0 : index
    %c0_12 = arith.constant 0 : index
    %c0_13 = arith.constant 0 : index
    %16 = vector.load %arg6[%c0_11, %c0_12, %c0_13] : memref<2x128x128xbf16, #tpu.memory_space<vmem>>, vector<1x128x128xbf16>
    %17 = vector.shape_cast %16 : vector<1x128x128xbf16> to vector<128x128xbf16>
    %c0_14 = arith.constant 0 : index
    %c0_15 = arith.constant 0 : index
    %c0_16 = arith.constant 0 : index
    %18 = vector.load %arg7[%c0_14, %c0_15, %c0_16] : memref<2x1x128xf32, #tpu.memory_space<vmem>>, vector<1x1x128xf32>
    %19 = vector.shape_cast %18 : vector<1x1x128xf32> to vector<1x128xf32>
    %c0_17 = arith.constant 0 : index
    %c0_18 = arith.constant 0 : index
    %c0_19 = arith.constant 0 : index
    %20 = vector.load %arg8[%c0_17, %c0_18, %c0_19] : memref<2x128x128xbf16, #tpu.memory_space<vmem>>, vector<1x128x128xbf16>
    %21 = vector.shape_cast %20 : vector<1x128x128xbf16> to vector<128x128xbf16>
    %c0_20 = arith.constant 0 : index
    %c0_21 = arith.constant 0 : index
    %c0_22 = arith.constant 0 : index
    %22 = vector.load %arg9[%c0_20, %c0_21, %c0_22] : memref<2x1x128xf32, #tpu.memory_space<vmem>>, vector<1x1x128xf32>
    %23 = vector.shape_cast %22 : vector<1x1x128xf32> to vector<1x128xf32>
    %cst_23 = arith.constant dense<0.000000e+00> : vector<8xf32>
    %24 = vector.multi_reduction <add>, %11, %cst_23 [1] : vector<8x128xf32> to vector<8xf32>
    %25 = vector.shape_cast %24 : vector<8xf32> to vector<8x1xf32>
    %cst_24 = arith.constant 3.125000e-02 : f32
    %26 = vector.broadcast %cst_24 : f32 to vector<8x1xf32>
    %27 = arith.mulf %25, %26 : vector<8x1xf32>
    %28 = vector.broadcast %27 : vector<8x1xf32> to vector<8x128xf32>
    %29 = arith.subf %11, %28 : vector<8x128xf32>
    %30 = vector.broadcast %4 : vector<1x128xf32> to vector<8x128xf32>
    %31 = arith.mulf %29, %30 : vector<8x128xf32>
    %32 = arith.mulf %31, %31 : vector<8x128xf32>
    %cst_25 = arith.constant dense<0.000000e+00> : vector<8xf32>
    %33 = vector.multi_reduction <add>, %32, %cst_25 [1] : vector<8x128xf32> to vector<8xf32>
    %34 = vector.shape_cast %33 : vector<8xf32> to vector<8x1xf32>
    %cst_26 = arith.constant 3.125000e-02 : f32
    %35 = vector.broadcast %cst_26 : f32 to vector<8x1xf32>
    %36 = arith.mulf %34, %35 : vector<8x1xf32>
    %cst_27 = arith.constant 9.99999974E-6 : f32
    %37 = vector.broadcast %cst_27 : f32 to vector<8x1xf32>
    %38 = arith.addf %36, %37 : vector<8x1xf32>
    %39 = math.rsqrt %38 : vector<8x1xf32>
    %40 = vector.broadcast %39 : vector<8x1xf32> to vector<8x128xf32>
    %41 = arith.mulf %31, %40 : vector<8x128xf32>
    %42 = vector.broadcast %13 : vector<1x128xf32> to vector<8x128xf32>
    %43 = arith.mulf %41, %42 : vector<8x128xf32>
    %44 = vector.broadcast %15 : vector<1x128xf32> to vector<8x128xf32>
    %45 = arith.addf %43, %44 : vector<8x128xf32>
    %46 = arith.truncf %45 : vector<8x128xf32> to vector<8x128xbf16>
    %cst_28 = arith.constant dense<0.000000e+00> : vector<8x128xf32>
    %47 = tpu.matmul %46, %17, %cst_28 {dimension_numbers = #tpu.dot_dimension_numbers<[1], [0], [0], [1], [0, 0, 1, 1], [], []>} : vector<8x128xbf16>, vector<128x128xbf16>, vector<8x128xf32> -> vector<8x128xf32>
    %48 = vector.broadcast %19 : vector<1x128xf32> to vector<8x128xf32>
    %49 = arith.addf %47, %48 : vector<8x128xf32>
    %cst_29 = arith.constant 0.000000e+00 : f32
    %50 = vector.broadcast %cst_29 : f32 to vector<8x128xf32>
    %51 = arith.maximumf %49, %50 : vector<8x128xf32>
    %52 = arith.truncf %51 : vector<8x128xf32> to vector<8x128xbf16>
    %cst_30 = arith.constant dense<0.000000e+00> : vector<8x128xf32>
    %53 = tpu.matmul %52, %21, %cst_30 {dimension_numbers = #tpu.dot_dimension_numbers<[1], [0], [0], [1], [0, 0, 1, 1], [], []>} : vector<8x128xbf16>, vector<128x128xbf16>, vector<8x128xf32> -> vector<8x128xf32>
    %54 = vector.broadcast %23 : vector<1x128xf32> to vector<8x128xf32>
    %55 = arith.addf %53, %54 : vector<8x128xf32>
    %56 = arith.addf %11, %55 : vector<8x128xf32>
    %c1 = arith.constant 1 : index
    %c0_31 = arith.constant 0 : index
    %c0_32 = arith.constant 0 : index
    %57 = vector.load %arg4[%c1, %c0_31, %c0_32] : memref<2x1x128xf32, #tpu.memory_space<vmem>>, vector<1x1x128xf32>
    %58 = vector.shape_cast %57 : vector<1x1x128xf32> to vector<1x128xf32>
    %c1_33 = arith.constant 1 : index
    %c0_34 = arith.constant 0 : index
    %c0_35 = arith.constant 0 : index
    %59 = vector.load %arg5[%c1_33, %c0_34, %c0_35] : memref<2x1x128xf32, #tpu.memory_space<vmem>>, vector<1x1x128xf32>
    %60 = vector.shape_cast %59 : vector<1x1x128xf32> to vector<1x128xf32>
    %c1_36 = arith.constant 1 : index
    %c0_37 = arith.constant 0 : index
    %c0_38 = arith.constant 0 : index
    %61 = vector.load %arg6[%c1_36, %c0_37, %c0_38] : memref<2x128x128xbf16, #tpu.memory_space<vmem>>, vector<1x128x128xbf16>
    %62 = vector.shape_cast %61 : vector<1x128x128xbf16> to vector<128x128xbf16>
    %c1_39 = arith.constant 1 : index
    %c0_40 = arith.constant 0 : index
    %c0_41 = arith.constant 0 : index
    %63 = vector.load %arg7[%c1_39, %c0_40, %c0_41] : memref<2x1x128xf32, #tpu.memory_space<vmem>>, vector<1x1x128xf32>
    %64 = vector.shape_cast %63 : vector<1x1x128xf32> to vector<1x128xf32>
    %c1_42 = arith.constant 1 : index
    %c0_43 = arith.constant 0 : index
    %c0_44 = arith.constant 0 : index
    %65 = vector.load %arg8[%c1_42, %c0_43, %c0_44] : memref<2x128x128xbf16, #tpu.memory_space<vmem>>, vector<1x128x128xbf16>
    %66 = vector.shape_cast %65 : vector<1x128x128xbf16> to vector<128x128xbf16>
    %c1_45 = arith.constant 1 : index
    %c0_46 = arith.constant 0 : index
    %c0_47 = arith.constant 0 : index
    %67 = vector.load %arg9[%c1_45, %c0_46, %c0_47] : memref<2x1x128xf32, #tpu.memory_space<vmem>>, vector<1x1x128xf32>
    %68 = vector.shape_cast %67 : vector<1x1x128xf32> to vector<1x128xf32>
    %cst_48 = arith.constant dense<0.000000e+00> : vector<8xf32>
    %69 = vector.multi_reduction <add>, %56, %cst_48 [1] : vector<8x128xf32> to vector<8xf32>
    %70 = vector.shape_cast %69 : vector<8xf32> to vector<8x1xf32>
    %cst_49 = arith.constant 3.125000e-02 : f32
    %71 = vector.broadcast %cst_49 : f32 to vector<8x1xf32>
    %72 = arith.mulf %70, %71 : vector<8x1xf32>
    %73 = vector.broadcast %72 : vector<8x1xf32> to vector<8x128xf32>
    %74 = arith.subf %56, %73 : vector<8x128xf32>
    %75 = vector.broadcast %4 : vector<1x128xf32> to vector<8x128xf32>
    %76 = arith.mulf %74, %75 : vector<8x128xf32>
    %77 = arith.mulf %76, %76 : vector<8x128xf32>
    %cst_50 = arith.constant dense<0.000000e+00> : vector<8xf32>
    %78 = vector.multi_reduction <add>, %77, %cst_50 [1] : vector<8x128xf32> to vector<8xf32>
    %79 = vector.shape_cast %78 : vector<8xf32> to vector<8x1xf32>
    %cst_51 = arith.constant 3.125000e-02 : f32
    %80 = vector.broadcast %cst_51 : f32 to vector<8x1xf32>
    %81 = arith.mulf %79, %80 : vector<8x1xf32>
    %cst_52 = arith.constant 9.99999974E-6 : f32
    %82 = vector.broadcast %cst_52 : f32 to vector<8x1xf32>
    %83 = arith.addf %81, %82 : vector<8x1xf32>
    %84 = math.rsqrt %83 : vector<8x1xf32>
    %85 = vector.broadcast %84 : vector<8x1xf32> to vector<8x128xf32>
    %86 = arith.mulf %76, %85 : vector<8x128xf32>
    %87 = vector.broadcast %58 : vector<1x128xf32> to vector<8x128xf32>
    %88 = arith.mulf %86, %87 : vector<8x128xf32>
    %89 = vector.broadcast %60 : vector<1x128xf32> to vector<8x128xf32>
    %90 = arith.addf %88, %89 : vector<8x128xf32>
    %91 = arith.truncf %90 : vector<8x128xf32> to vector<8x128xbf16>
    %cst_53 = arith.constant dense<0.000000e+00> : vector<8x128xf32>
    %92 = tpu.matmul %91, %62, %cst_53 {dimension_numbers = #tpu.dot_dimension_numbers<[1], [0], [0], [1], [0, 0, 1, 1], [], []>} : vector<8x128xbf16>, vector<128x128xbf16>, vector<8x128xf32> -> vector<8x128xf32>
    %93 = vector.broadcast %64 : vector<1x128xf32> to vector<8x128xf32>
    %94 = arith.addf %92, %93 : vector<8x128xf32>
    %cst_54 = arith.constant 0.000000e+00 : f32
    %95 = vector.broadcast %cst_54 : f32 to vector<8x128xf32>
    %96 = arith.maximumf %94, %95 : vector<8x128xf32>
    %97 = arith.truncf %96 : vector<8x128xf32> to vector<8x128xbf16>
    %cst_55 = arith.constant dense<0.000000e+00> : vector<8x128xf32>
    %98 = tpu.matmul %97, %66, %cst_55 {dimension_numbers = #tpu.dot_dimension_numbers<[1], [0], [0], [1], [0, 0, 1, 1], [], []>} : vector<8x128xbf16>, vector<128x128xbf16>, vector<8x128xf32> -> vector<8x128xf32>
    %99 = vector.broadcast %68 : vector<1x128xf32> to vector<8x128xf32>
    %100 = arith.addf %98, %99 : vector<8x128xf32>
    %101 = arith.addf %56, %100 : vector<8x128xf32>
    %c0_56 = arith.constant 0 : index
    %c0_57 = arith.constant 0 : index
    %102 = vector.load %arg10[%c0_56, %c0_57] : memref<1x128xf32, #tpu.memory_space<vmem>>, vector<1x128xf32>
    %c0_58 = arith.constant 0 : index
    %c0_59 = arith.constant 0 : index
    %103 = vector.load %arg11[%c0_58, %c0_59] : memref<1x128xf32, #tpu.memory_space<vmem>>, vector<1x128xf32>
    %cst_60 = arith.constant dense<0.000000e+00> : vector<8xf32>
    %104 = vector.multi_reduction <add>, %101, %cst_60 [1] : vector<8x128xf32> to vector<8xf32>
    %105 = vector.shape_cast %104 : vector<8xf32> to vector<8x1xf32>
    %cst_61 = arith.constant 3.125000e-02 : f32
    %106 = vector.broadcast %cst_61 : f32 to vector<8x1xf32>
    %107 = arith.mulf %105, %106 : vector<8x1xf32>
    %108 = vector.broadcast %107 : vector<8x1xf32> to vector<8x128xf32>
    %109 = arith.subf %101, %108 : vector<8x128xf32>
    %110 = vector.broadcast %4 : vector<1x128xf32> to vector<8x128xf32>
    %111 = arith.mulf %109, %110 : vector<8x128xf32>
    %112 = arith.mulf %111, %111 : vector<8x128xf32>
    %cst_62 = arith.constant dense<0.000000e+00> : vector<8xf32>
    %113 = vector.multi_reduction <add>, %112, %cst_62 [1] : vector<8x128xf32> to vector<8xf32>
    %114 = vector.shape_cast %113 : vector<8xf32> to vector<8x1xf32>
    %cst_63 = arith.constant 3.125000e-02 : f32
    %115 = vector.broadcast %cst_63 : f32 to vector<8x1xf32>
    %116 = arith.mulf %114, %115 : vector<8x1xf32>
    %cst_64 = arith.constant 9.99999974E-6 : f32
    %117 = vector.broadcast %cst_64 : f32 to vector<8x1xf32>
    %118 = arith.addf %116, %117 : vector<8x1xf32>
    %119 = math.rsqrt %118 : vector<8x1xf32>
    %120 = vector.broadcast %119 : vector<8x1xf32> to vector<8x128xf32>
    %121 = arith.mulf %111, %120 : vector<8x128xf32>
    %122 = vector.broadcast %102 : vector<1x128xf32> to vector<8x128xf32>
    %123 = arith.mulf %121, %122 : vector<8x128xf32>
    %124 = vector.broadcast %103 : vector<1x128xf32> to vector<8x128xf32>
    %125 = arith.addf %123, %124 : vector<8x128xf32>
    %cst_65 = arith.constant 0.000000e+00 : f32
    %126 = vector.broadcast %cst_65 : f32 to vector<8x128xf32>
    %127 = arith.maximumf %125, %126 : vector<8x128xf32>
    %128 = arith.truncf %127 : vector<8x128xf32> to vector<8x128xbf16>
    %c0_66 = arith.constant 0 : index
    %c0_67 = arith.constant 0 : index
    %129 = vector.load %arg12[%c0_66, %c0_67] : memref<128x128xbf16, #tpu.memory_space<vmem>>, vector<128x128xbf16>
    %cst_68 = arith.constant dense<0.000000e+00> : vector<8x128xf32>
    %130 = tpu.matmul %128, %129, %cst_68 {dimension_numbers = #tpu.dot_dimension_numbers<[1], [0], [0], [1], [0, 0, 1, 1], [], []>} : vector<8x128xbf16>, vector<128x128xbf16>, vector<8x128xf32> -> vector<8x128xf32>
    %131 = arith.addf %127, %130 : vector<8x128xf32>
    %c0_69 = arith.constant 0 : index
    %c0_70 = arith.constant 0 : index
    %132 = vector.load %arg13[%c0_69, %c0_70] : memref<1x128xf32, #tpu.memory_space<vmem>>, vector<1x128xf32>
    %133 = vector.broadcast %132 : vector<1x128xf32> to vector<8x128xf32>
    %134 = arith.addf %131, %133 : vector<8x128xf32>
    %c0_71 = arith.constant 0 : index
    %c0_72 = arith.constant 0 : index
    %135 = vector.load %arg14[%c0_71, %c0_72] : memref<8x128xf32, #tpu.memory_space<vmem>>, vector<8x128xf32>
    tpu.vector_store %arg14[%c0_71, %c0_72], %134 {strides = array<i32>} : memref<8x128xf32, #tpu.memory_space<vmem>>, vector<8x128xf32>,
    return
  }
  func.func @transform_0(%arg0: i32) -> (i32, i32) {
    %c0_i32 = arith.constant 0 : i32
    %c0_i32_0 = arith.constant 0 : i32
    return %arg0, %c0_i32 : i32, i32
  }
  func.func @transform_1(%arg0: i32) -> (i32, i32) {
    %c0_i32 = arith.constant 0 : i32
    %c0_i32_0 = arith.constant 0 : i32
    %c0_i32_1 = arith.constant 0 : i32
    return %c0_i32, %c0_i32_0 : i32, i32
  }
  func.func @transform_2(%arg0: i32) -> (i32, i32) {
    %c0_i32 = arith.constant 0 : i32
    %c0_i32_0 = arith.constant 0 : i32
    %c0_i32_1 = arith.constant 0 : i32
    return %c0_i32, %c0_i32_0 : i32, i32
  }
  func.func @transform_3(%arg0: i32) -> (i32, i32, i32) {
    %c0_i32 = arith.constant 0 : i32
    %c0_i32_0 = arith.constant 0 : i32
    %c0_i32_1 = arith.constant 0 : i32
    %c0_i32_2 = arith.constant 0 : i32
    return %c0_i32, %c0_i32_0, %c0_i32_1 : i32, i32, i32
  }
  func.func @transform_4(%arg0: i32) -> (i32, i32, i32) {
    %c0_i32 = arith.constant 0 : i32
    %c0_i32_0 = arith.constant 0 : i32
    %c0_i32_1 = arith.constant 0 : i32
    %c0_i32_2 = arith.constant 0 : i32
    return %c0_i32, %c0_i32_0, %c0_i32_1 : i32, i32, i32
  }
  func.func @transform_5(%arg0: i32) -> (i32, i32, i32) {
    %c0_i32 = arith.constant 0 : i32
    %c0_i32_0 = arith.constant 0 : i32
    %c0_i32_1 = arith.constant 0 : i32
    %c0_i32_2 = arith.constant 0 : i32
    return %c0_i32, %c0_i32_0, %c0_i32_1 : i32, i32, i32
  }
  func.func @transform_6(%arg0: i32) -> (i32, i32, i32) {
    %c0_i32 = arith.constant 0 : i32
    %c0_i32_0 = arith.constant 0 : i32
    %c0_i32_1 = arith.constant 0 : i32
    %c0_i32_2 = arith.constant 0 : i32
    return %c0_i32, %c0_i32_0, %c0_i32_1 : i32, i32, i32
  }
  func.func @transform_7(%arg0: i32) -> (i32, i32, i32) {
    %c0_i32 = arith.constant 0 : i32
    %c0_i32_0 = arith.constant 0 : i32
    %c0_i32_1 = arith.constant 0 : i32
    %c0_i32_2 = arith.constant 0 : i32
    return %c0_i32, %c0_i32_0, %c0_i32_1 : i32, i32, i32
  }
  func.func @transform_8(%arg0: i32) -> (i32, i32, i32) {
    %c0_i32 = arith.constant 0 : i32
    %c0_i32_0 = arith.constant 0 : i32
    %c0_i32_1 = arith.constant 0 : i32
    %c0_i32_2 = arith.constant 0 : i32
    return %c0_i32, %c0_i32_0, %c0_i32_1 : i32, i32, i32
  }
  func.func @transform_9(%arg0: i32) -> (i32, i32) {
    %c0_i32 = arith.constant 0 : i32
    %c0_i32_0 = arith.constant 0 : i32
    %c0_i32_1 = arith.constant 0 : i32
    return %c0_i32, %c0_i32_0 : i32, i32
  }
  func.func @transform_10(%arg0: i32) -> (i32, i32) {
    %c0_i32 = arith.constant 0 : i32
    %c0_i32_0 = arith.constant 0 : i32
    %c0_i32_1 = arith.constant 0 : i32
    return %c0_i32, %c0_i32_0 : i32, i32
  }
  func.func @transform_11(%arg0: i32) -> (i32, i32) {
    %c0_i32 = arith.constant 0 : i32
    %c0_i32_0 = arith.constant 0 : i32
    %c0_i32_1 = arith.constant 0 : i32
    return %c0_i32, %c0_i32_0 : i32, i32
  }
  func.func @transform_12(%arg0: i32) -> (i32, i32) {
    %c0_i32 = arith.constant 0 : i32
    %c0_i32_0 = arith.constant 0 : i32
    %c0_i32_1 = arith.constant 0 : i32
    return %c0_i32, %c0_i32_0 : i32, i32
  }
  func.func @transform_13(%arg0: i32) -> (i32, i32) {
    %c0_i32 = arith.constant 0 : i32
    %c0_i32_0 = arith.constant 0 : i32
    return %arg0, %c0_i32 : i32, i32
  }
}

module attributes {stable_mosaic.version = 11 : i64} {
  func.func @_resnet_kernel(%arg0: i32, %arg1: memref<8x16xf32, #tpu.memory_space<vmem>>, %arg2: memref<16x128xbf16, #tpu.memory_space<vmem>>, %arg3: memref<1x128xf32, #tpu.memory_space<vmem>>, %arg4: memref<2x1x128xf32, #tpu.memory_space<vmem>>, %arg5: memref<2x1x128xf32, #tpu.memory_space<vmem>>, %arg6: memref<2x128x128xbf16, #tpu.memory_space<vmem>>, %arg7: memref<2x1x128xf32, #tpu.memory_space<vmem>>, %arg8: memref<2x128x128xbf16, #tpu.memory_space<vmem>>, %arg9: memref<2x1x128xf32, #tpu.memory_space<vmem>>, %arg10: memref<1x128xf32, #tpu.memory_space<vmem>>, %arg11: memref<1x128xf32, #tpu.memory_space<vmem>>, %arg12: memref<128x128xbf16, #tpu.memory_space<vmem>>, %arg13: memref<1x128xf32, #tpu.memory_space<vmem>>, %arg14: memref<8x128xf32, #tpu.memory_space<vmem>>) attributes {dimension_semantics = [#tpu.dimension_semantics<parallel>], iteration_bounds = array<i64: 1>, scalar_prefetch = 0 : i64, scratch_operands = 0 : i64, tpu.core_type = #tpu.core_type<tc>, window_params = [{transform_indices = @transform_0, window_bounds = array<i64: 8, 16>}, {pipeline_mode = #tpu.pipeline_mode<synchronous>, transform_indices = @transform_1, window_bounds = array<i64: 16, 128>}, {pipeline_mode = #tpu.pipeline_mode<synchronous>, transform_indices = @transform_2, window_bounds = array<i64: 1, 128>}, {pipeline_mode = #tpu.pipeline_mode<synchronous>, transform_indices = @transform_3, window_bounds = array<i64: 2, 1, 128>}, {pipeline_mode = #tpu.pipeline_mode<synchronous>, transform_indices = @transform_4, window_bounds = array<i64: 2, 1, 128>}, {pipeline_mode = #tpu.pipeline_mode<synchronous>, transform_indices = @transform_5, window_bounds = array<i64: 2, 128, 128>}, {pipeline_mode = #tpu.pipeline_mode<synchronous>, transform_indices = @transform_6, window_bounds = array<i64: 2, 1, 128>}, {pipeline_mode = #tpu.pipeline_mode<synchronous>, transform_indices = @transform_7, window_bounds = array<i64: 2, 128, 128>}, {pipeline_mode = #tpu.pipeline_mode<synchronous>, transform_indices = @transform_8, window_bounds = array<i64: 2, 1, 128>}, {pipeline_mode = #tpu.pipeline_mode<synchronous>, transform_indices = @transform_9, window_bounds = array<i64: 1, 128>}, {pipeline_mode = #tpu.pipeline_mode<synchronous>, transform_indices = @transform_10, window_bounds = array<i64: 1, 128>}, {pipeline_mode = #tpu.pipeline_mode<synchronous>, transform_indices = @transform_11, window_bounds = array<i64: 128, 128>}, {pipeline_mode = #tpu.pipeline_mode<synchronous>, transform_indices = @transform_12, window_bounds = array<i64: 1, 128>}, {transform_indices = @transform_13, window_bounds = array<i64: 8, 128>}]} {
    %0 = tpu.iota {dimensions = array<i32: 1>} : vector<1x128xi32>
    %c32_i32 = arith.constant 32 : i32
    %1 = vector.broadcast %c32_i32 : i32 to vector<1x128xi32>
    %2 = arith.cmpi slt, %0, %1 : vector<1x128xi32>
    %3 = arith.extui %2 : vector<1x128xi1> to vector<1x128xi32>
    %4 = arith.sitofp %3 : vector<1x128xi32> to vector<1x128xf32>
    %c0 = arith.constant 0 : index
    %c0_0 = arith.constant 0 : index
    %5 = vector.load %arg1[%c0, %c0_0] : memref<8x16xf32, #tpu.memory_space<vmem>>, vector<8x16xf32>
    %6 = arith.truncf %5 : vector<8x16xf32> to vector<8x16xbf16>
    %c0_1 = arith.constant 0 : index
    %c0_2 = arith.constant 0 : index
    %7 = vector.load %arg2[%c0_1, %c0_2] : memref<16x128xbf16, #tpu.memory_space<vmem>>, vector<16x128xbf16>
    %cst = arith.constant dense<0.000000e+00> : vector<8x128xf32>
    %8 = tpu.matmul %6, %7, %cst {dimension_numbers = #tpu.dot_dimension_numbers<[1], [0], [0], [1], [0, 0, 1, 1], [], []>} : vector<8x16xbf16>, vector<16x128xbf16>, vector<8x128xf32> -> vector<8x128xf32>
    %c0_3 = arith.constant 0 : index
    %c0_4 = arith.constant 0 : index
    %9 = vector.load %arg3[%c0_3, %c0_4] : memref<1x128xf32, #tpu.memory_space<vmem>>, vector<1x128xf32>
    %10 = vector.broadcast %9 : vector<1x128xf32> to vector<8x128xf32>
    %11 = arith.addf %8, %10 : vector<8x128xf32>
    %c0_5 = arith.constant 0 : index
    %c0_6 = arith.constant 0 : index
    %c0_7 = arith.constant 0 : index
    %12 = vector.load %arg4[%c0_5, %c0_6, %c0_7] : memref<2x1x128xf32, #tpu.memory_space<vmem>>, vector<1x1x128xf32>
    %13 = vector.shape_cast %12 : vector<1x1x128xf32> to vector<1x128xf32>
    %c0_8 = arith.constant 0 : index
    %c0_9 = arith.constant 0 : index
    %c0_10 = arith.constant 0 : index
    %14 = vector.load %arg5[%c0_8, %c0_9, %c0_10] : memref<2x1x128xf32, #tpu.memory_space<vmem>>, vector<1x1x128xf32>
    %15 = vector.shape_cast %14 : vector<1x1x128xf32> to vector<1x128xf32>
    %c0_11 = arith.constant 0 : index
    %c0_12 = arith.constant 0 : index
    %c0_13 = arith.constant 0 : index
    %16 = vector.load %arg6[%c0_11, %c0_12, %c0_13] : memref<2x128x128xbf16, #tpu.memory_space<vmem>>, vector<1x128x128xbf16>
    %17 = vector.shape_cast %16 : vector<1x128x128xbf16> to vector<128x128xbf16>
    %c0_14 = arith.constant 0 : index
    %c0_15 = arith.constant 0 : index
    %c0_16 = arith.constant 0 : index
    %18 = vector.load %arg7[%c0_14, %c0_15, %c0_16] : memref<2x1x128xf32, #tpu.memory_space<vmem>>, vector<1x1x128xf32>
    %19 = vector.shape_cast %18 : vector<1x1x128xf32> to vector<1x128xf32>
    %c0_17 = arith.constant 0 : index
    %c0_18 = arith.constant 0 : index
    %c0_19 = arith.constant 0 : index
    %20 = vector.load %arg8[%c0_17, %c0_18, %c0_19] : memref<2x128x128xbf16, #tpu.memory_space<vmem>>, vector<1x128x128xbf16>
    %21 = vector.shape_cast %20 : vector<1x128x128xbf16> to vector<128x128xbf16>
    %c0_20 = arith.constant 0 : index
    %c0_21 = arith.constant 0 : index
    %c0_22 = arith.constant 0 : index
    %22 = vector.load %arg9[%c0_20, %c0_21, %c0_22] : memref<2x1x128xf32, #tpu.memory_space<vmem>>, vector<1x1x128xf32>
    %23 = vector.shape_cast %22 : vector<1x1x128xf32> to vector<1x128xf32>
    %cst_23 = arith.constant dense<0.000000e+00> : vector<8xf32>
    %24 = vector.multi_reduction <add>, %11, %cst_23 [1] : vector<8x128xf32> to vector<8xf32>
    %25 = vector.shape_cast %24 : vector<8xf32> to vector<8x1xf32>
    %cst_24 = arith.constant 3.125000e-02 : f32
    %26 = vector.broadcast %cst_24 : f32 to vector<8x1xf32>
    %27 = arith.mulf %25, %26 : vector<8x1xf32>
    %28 = vector.broadcast %27 : vector<8x1xf32> to vector<8x128xf32>
    %29 = arith.subf %11, %28 : vector<8x128xf32>
    %30 = vector.broadcast %4 : vector<1x128xf32> to vector<8x128xf32>
    %31 = arith.mulf %29, %30 : vector<8x128xf32>
    %32 = arith.mulf %31, %31 : vector<8x128xf32>
    %cst_25 = arith.constant dense<0.000000e+00> : vector<8xf32>
    %33 = vector.multi_reduction <add>, %32, %cst_25 [1] : vector<8x128xf32> to vector<8xf32>
    %34 = vector.shape_cast %33 : vector<8xf32> to vector<8x1xf32>
    %cst_26 = arith.constant 3.125000e-02 : f32
    %35 = vector.broadcast %cst_26 : f32 to vector<8x1xf32>
    %36 = arith.mulf %34, %35 : vector<8x1xf32>
    %cst_27 = arith.constant 9.99999974E-6 : f32
    %37 = vector.broadcast %cst_27 : f32 to vector<8x1xf32>
    %38 = arith.addf %36, %37 : vector<8x1xf32>
    %39 = math.rsqrt %38 : vector<8x1xf32>
    %40 = vector.broadcast %39 : vector<8x1xf32> to vector<8x128xf32>
    %41 = arith.mulf %31, %40 : vector<8x128xf32>
    %42 = vector.broadcast %13 : vector<1x128xf32> to vector<8x128xf32>
    %43 = arith.mulf %41, %42 : vector<8x128xf32>
    %44 = vector.broadcast %15 : vector<1x128xf32> to vector<8x128xf32>
    %45 = arith.addf %43, %44 : vector<8x128xf32>
    %46 = arith.truncf %45 : vector<8x128xf32> to vector<8x128xbf16>
    %cst_28 = arith.constant dense<0.000000e+00> : vector<8x128xf32>
    %47 = tpu.matmul %46, %17, %cst_28 {dimension_numbers = #tpu.dot_dimension_numbers<[1], [0], [0], [1], [0, 0, 1, 1], [], []>} : vector<8x128xbf16>, vector<128x128xbf16>, vector<8x128xf32> -> vector<8x128xf32>
    %48 = vector.broadcast %19 : vector<1x128xf32> to vector<8x128xf32>
    %49 = arith.addf %47, %48 : vector<8x128xf32>
    %cst_29 = arith.constant 0.000000e+00 : f32
    %50 = vector.broadcast %cst_29 : f32 to vector<8x128xf32>
    %51 = arith.maximumf %49, %50 : vector<8x128xf32>
    %52 = arith.truncf %51 : vector<8x128xf32> to vector<8x128xbf16>
    %cst_30 = arith.constant dense<0.000000e+00> : vector<8x128xf32>
    %53 = tpu.matmul %52, %21, %cst_30 {dimension_numbers = #tpu.dot_dimension_numbers<[1], [0], [0], [1], [0, 0, 1, 1], [], []>} : vector<8x128xbf16>, vector<128x128xbf16>, vector<8x128xf32> -> vector<8x128xf32>
    %54 = vector.broadcast %23 : vector<1x128xf32> to vector<8x128xf32>
    %55 = arith.addf %53, %54 : vector<8x128xf32>
    %56 = arith.addf %11, %55 : vector<8x128xf32>
    %c1 = arith.constant 1 : index
    %c0_31 = arith.constant 0 : index
    %c0_32 = arith.constant 0 : index
    %57 = vector.load %arg4[%c1, %c0_31, %c0_32] : memref<2x1x128xf32, #tpu.memory_space<vmem>>, vector<1x1x128xf32>
    %58 = vector.shape_cast %57 : vector<1x1x128xf32> to vector<1x128xf32>
    %c1_33 = arith.constant 1 : index
    %c0_34 = arith.constant 0 : index
    %c0_35 = arith.constant 0 : index
    %59 = vector.load %arg5[%c1_33, %c0_34, %c0_35] : memref<2x1x128xf32, #tpu.memory_space<vmem>>, vector<1x1x128xf32>
    %60 = vector.shape_cast %59 : vector<1x1x128xf32> to vector<1x128xf32>
    %c1_36 = arith.constant 1 : index
    %c0_37 = arith.constant 0 : index
    %c0_38 = arith.constant 0 : index
    %61 = vector.load %arg6[%c1_36, %c0_37, %c0_38] : memref<2x128x128xbf16, #tpu.memory_space<vmem>>, vector<1x128x128xbf16>
    %62 = vector.shape_cast %61 : vector<1x128x128xbf16> to vector<128x128xbf16>
    %c1_39 = arith.constant 1 : index
    %c0_40 = arith.constant 0 : index
    %c0_41 = arith.constant 0 : index
    %63 = vector.load %arg7[%c1_39, %c0_40, %c0_41] : memref<2x1x128xf32, #tpu.memory_space<vmem>>, vector<1x1x128xf32>
    %64 = vector.shape_cast %63 : vector<1x1x128xf32> to vector<1x128xf32>
    %c1_42 = arith.constant 1 : index
    %c0_43 = arith.constant 0 : index
    %c0_44 = arith.constant 0 : index
    %65 = vector.load %arg8[%c1_42, %c0_43, %c0_44] : memref<2x128x128xbf16, #tpu.memory_space<vmem>>, vector<1x128x128xbf16>
    %66 = vector.shape_cast %65 : vector<1x128x128xbf16> to vector<128x128xbf16>
    %c1_45 = arith.constant 1 : index
    %c0_46 = arith.constant 0 : index
    %c0_47 = arith.constant 0 : index
    %67 = vector.load %arg9[%c1_45, %c0_46, %c0_47] : memref<2x1x128xf32, #tpu.memory_space<vmem>>, vector<1x1x128xf32>
    %68 = vector.shape_cast %67 : vector<1x1x128xf32> to vector<1x128xf32>
    %cst_48 = arith.constant dense<0.000000e+00> : vector<8xf32>
    %69 = vector.multi_reduction <add>, %56, %cst_48 [1] : vector<8x128xf32> to vector<8xf32>
    %70 = vector.shape_cast %69 : vector<8xf32> to vector<8x1xf32>
    %cst_49 = arith.constant 3.125000e-02 : f32
    %71 = vector.broadcast %cst_49 : f32 to vector<8x1xf32>
    %72 = arith.mulf %70, %71 : vector<8x1xf32>
    %73 = vector.broadcast %72 : vector<8x1xf32> to vector<8x128xf32>
    %74 = arith.subf %56, %73 : vector<8x128xf32>
    %75 = vector.broadcast %4 : vector<1x128xf32> to vector<8x128xf32>
    %76 = arith.mulf %74, %75 : vector<8x128xf32>
    %77 = arith.mulf %76, %76 : vector<8x128xf32>
    %cst_50 = arith.constant dense<0.000000e+00> : vector<8xf32>
    %78 = vector.multi_reduction <add>, %77, %cst_50 [1] : vector<8x128xf32> to vector<8xf32>
    %79 = vector.shape_cast %78 : vector<8xf32> to vector<8x1xf32>
    %cst_51 = arith.constant 3.125000e-02 : f32
    %80 = vector.broadcast %cst_51 : f32 to vector<8x1xf32>
    %81 = arith.mulf %79, %80 : vector<8x1xf32>
    %cst_52 = arith.constant 9.99999974E-6 : f32
    %82 = vector.broadcast %cst_52 : f32 to vector<8x1xf32>
    %83 = arith.addf %81, %82 : vector<8x1xf32>
    %84 = math.rsqrt %83 : vector<8x1xf32>
    %85 = vector.broadcast %84 : vector<8x1xf32> to vector<8x128xf32>
    %86 = arith.mulf %76, %85 : vector<8x128xf32>
    %87 = vector.broadcast %58 : vector<1x128xf32> to vector<8x128xf32>
    %88 = arith.mulf %86, %87 : vector<8x128xf32>
    %89 = vector.broadcast %60 : vector<1x128xf32> to vector<8x128xf32>
    %90 = arith.addf %88, %89 : vector<8x128xf32>
    %91 = arith.truncf %90 : vector<8x128xf32> to vector<8x128xbf16>
    %cst_53 = arith.constant dense<0.000000e+00> : vector<8x128xf32>
    %92 = tpu.matmul %91, %62, %cst_53 {dimension_numbers = #tpu.dot_dimension_numbers<[1], [0], [0], [1], [0, 0, 1, 1], [], []>} : vector<8x128xbf16>, vector<128x128xbf16>, vector<8x128xf32> -> vector<8x128xf32>
    %93 = vector.broadcast %64 : vector<1x128xf32> to vector<8x128xf32>
    %94 = arith.addf %92, %93 : vector<8x128xf32>
    %cst_54 = arith.constant 0.000000e+00 : f32
    %95 = vector.broadcast %cst_54 : f32 to vector<8x128xf32>
    %96 = arith.maximumf %94, %95 : vector<8x128xf32>
    %97 = arith.truncf %96 : vector<8x128xf32> to vector<8x128xbf16>
    %cst_55 = arith.constant dense<0.000000e+00> : vector<8x128xf32>
    %98 = tpu.matmul %97, %66, %cst_55 {dimension_numbers = #tpu.dot_dimension_numbers<[1], [0], [0], [1], [0, 0, 1, 1], [], []>} : vector<8x128xbf16>, vector<128x128xbf16>, vector<8x128xf32> -> vector<8x128xf32>
    %99 = vector.broadcast %68 : vector<1x128xf32> to vector<8x128xf32>
    %100 = arith.addf %98, %99 : vector<8x128xf32>
    %101 = arith.addf %56, %100 : vector<8x128xf32>
    %c0_56 = arith.constant 0 : index
    %c0_57 = arith.constant 0 : index
    %102 = vector.load %arg10[%c0_56, %c0_57] : memref<1x128xf32, #tpu.memory_space<vmem>>, vector<1x128xf32>
    %c0_58 = arith.constant 0 : index
    %c0_59 = arith.constant 0 : index
    %103 = vector.load %arg11[%c0_58, %c0_59] : memref<1x128xf32, #tpu.memory_space<vmem>>, vector<1x128xf32>
    %cst_60 = arith.constant dense<0.000000e+00> : vector<8xf32>
    %104 = vector.multi_reduction <add>, %101, %cst_60 [1] : vector<8x128xf32> to vector<8xf32>
    %105 = vector.shape_cast %104 : vector<8xf32> to vector<8x1xf32>
    %cst_61 = arith.constant 3.125000e-02 : f32
    %106 = vector.broadcast %cst_61 : f32 to vector<8x1xf32>
    %107 = arith.mulf %105, %106 : vector<8x1xf32>
    %108 = vector.broadcast %107 : vector<8x1xf32> to vector<8x128xf32>
    %109 = arith.subf %101, %108 : vector<8x128xf32>
    %110 = vector.broadcast %4 : vector<1x128xf32> to vector<8x128xf32>
    %111 = arith.mulf %109, %110 : vector<8x128xf32>
    %112 = arith.mulf %111, %111 : vector<8x128xf32>
    %cst_62 = arith.constant dense<0.000000e+00> : vector<8xf32>
    %113 = vector.multi_reduction <add>, %112, %cst_62 [1] : vector<8x128xf32> to vector<8xf32>
    %114 = vector.shape_cast %113 : vector<8xf32> to vector<8x1xf32>
    %cst_63 = arith.constant 3.125000e-02 : f32
    %115 = vector.broadcast %cst_63 : f32 to vector<8x1xf32>
    %116 = arith.mulf %114, %115 : vector<8x1xf32>
    %cst_64 = arith.constant 9.99999974E-6 : f32
    %117 = vector.broadcast %cst_64 : f32 to vector<8x1xf32>
    %118 = arith.addf %116, %117 : vector<8x1xf32>
    %119 = math.rsqrt %118 : vector<8x1xf32>
    %120 = vector.broadcast %119 : vector<8x1xf32> to vector<8x128xf32>
    %121 = arith.mulf %111, %120 : vector<8x128xf32>
    %122 = vector.broadcast %102 : vector<1x128xf32> to vector<8x128xf32>
    %123 = arith.mulf %121, %122 : vector<8x128xf32>
    %124 = vector.broadcast %103 : vector<1x128xf32> to vector<8x128xf32>
    %125 = arith.addf %123, %124 : vector<8x128xf32>
    %cst_65 = arith.constant 0.000000e+00 : f32
    %126 = vector.broadcast %cst_65 : f32 to vector<8x128xf32>
    %127 = arith.maximumf %125, %126 : vector<8x128xf32>
    %128 = arith.truncf %127 : vector<8x128xf32> to vector<8x128xbf16>
    %c0_66 = arith.constant 0 : index
    %c0_67 = arith.constant 0 : index
    %129 = vector.load %arg12[%c0_66, %c0_67] : memref<128x128xbf16, #tpu.memory_space<vmem>>, vector<128x128xbf16>
    %cst_68 = arith.constant dense<0.000000e+00> : vector<8x128xf32>
    %130 = tpu.matmul %128, %129, %cst_68 {dimension_numbers = #tpu.dot_dimension_numbers<[1], [0], [0], [1], [0, 0, 1, 1], [], []>} : vector<8x128xbf16>, vector<128x128xbf16>, vector<8x128xf32> -> vector<8x128xf32>
    %131 = arith.addf %127, %130 : vector<8x128xf32>
    %c0_69 = arith.constant 0 : index
    %c0_70 = arith.constant 0 : index
    %132 = vector.load %arg13[%c0_69, %c0_70] : memref<1x128xf32, #tpu.memory_space<vmem>>, vector<1x128xf32>
    %133 = vector.broadcast %132 : vector<1x128xf32> to vector<8x128xf32>
    %134 = arith.addf %131, %133 : vector<8x128xf32>
    %c0_71 = arith.constant 0 : index
    %c0_72 = arith.constant 0 : index
    %135 = vector.load %arg14[%c0_71, %c0_72] : memref<8x128xf32, #tpu.memory_space<vmem>>, vector<8x128xf32>
    tpu.vector_store %arg14[%c0_71, %c0_72], %134 {strides = array<i32>} : memref<8x128xf32, #tpu.memory_space<vmem>>, vector<8x128xf32>,
    return
  }
  func.func @transform_0(%arg0: i32) -> (i32, i32) {
    %c0_i32 = arith.constant 0 : i32
    %c0_i32_0 = arith.constant 0 : i32
    return %arg0, %c0_i32 : i32, i32
  }
  func.func @transform_1(%arg0: i32) -> (i32, i32) {
    %c0_i32 = arith.constant 0 : i32
    %c0_i32_0 = arith.constant 0 : i32
    %c0_i32_1 = arith.constant 0 : i32
    return %c0_i32, %c0_i32_0 : i32, i32
  }
  func.func @transform_2(%arg0: i32) -> (i32, i32) {
    %c0_i32 = arith.constant 0 : i32
    %c0_i32_0 = arith.constant 0 : i32
    %c0_i32_1 = arith.constant 0 : i32
    return %c0_i32, %c0_i32_0 : i32, i32
  }
  func.func @transform_3(%arg0: i32) -> (i32, i32, i32) {
    %c0_i32 = arith.constant 0 : i32
    %c0_i32_0 = arith.constant 0 : i32
    %c0_i32_1 = arith.constant 0 : i32
    %c0_i32_2 = arith.constant 0 : i32
    return %c0_i32, %c0_i32_0, %c0_i32_1 : i32, i32, i32
  }
  func.func @transform_4(%arg0: i32) -> (i32, i32, i32) {
    %c0_i32 = arith.constant 0 : i32
    %c0_i32_0 = arith.constant 0 : i32
    %c0_i32_1 = arith.constant 0 : i32
    %c0_i32_2 = arith.constant 0 : i32
    return %c0_i32, %c0_i32_0, %c0_i32_1 : i32, i32, i32
  }
  func.func @transform_5(%arg0: i32) -> (i32, i32, i32) {
    %c0_i32 = arith.constant 0 : i32
    %c0_i32_0 = arith.constant 0 : i32
    %c0_i32_1 = arith.constant 0 : i32
    %c0_i32_2 = arith.constant 0 : i32
    return %c0_i32, %c0_i32_0, %c0_i32_1 : i32, i32, i32
  }
  func.func @transform_6(%arg0: i32) -> (i32, i32, i32) {
    %c0_i32 = arith.constant 0 : i32
    %c0_i32_0 = arith.constant 0 : i32
    %c0_i32_1 = arith.constant 0 : i32
    %c0_i32_2 = arith.constant 0 : i32
    return %c0_i32, %c0_i32_0, %c0_i32_1 : i32, i32, i32
  }
  func.func @transform_7(%arg0: i32) -> (i32, i32, i32) {
    %c0_i32 = arith.constant 0 : i32
    %c0_i32_0 = arith.constant 0 : i32
    %c0_i32_1 = arith.constant 0 : i32
    %c0_i32_2 = arith.constant 0 : i32
    return %c0_i32, %c0_i32_0, %c0_i32_1 : i32, i32, i32
  }
  func.func @transform_8(%arg0: i32) -> (i32, i32, i32) {
    %c0_i32 = arith.constant 0 : i32
    %c0_i32_0 = arith.constant 0 : i32
    %c0_i32_1 = arith.constant 0 : i32
    %c0_i32_2 = arith.constant 0 : i32
    return %c0_i32, %c0_i32_0, %c0_i32_1 : i32, i32, i32
  }
  func.func @transform_9(%arg0: i32) -> (i32, i32) {
    %c0_i32 = arith.constant 0 : i32
    %c0_i32_0 = arith.constant 0 : i32
    %c0_i32_1 = arith.constant 0 : i32
    return %c0_i32, %c0_i32_0 : i32, i32
  }
  func.func @transform_10(%arg0: i32) -> (i32, i32) {
    %c0_i32 = arith.constant 0 : i32
    %c0_i32_0 = arith.constant 0 : i32
    %c0_i32_1 = arith.constant 0 : i32
    return %c0_i32, %c0_i32_0 : i32, i32
  }
  func.func @transform_11(%arg0: i32) -> (i32, i32) {
    %c0_i32 = arith.constant 0 : i32
    %c0_i32_0 = arith.constant 0 : i32
    %c0_i32_1 = arith.constant 0 : i32
    return %c0_i32, %c0_i32_0 : i32, i32
  }
  func.func @transform_12(%arg0: i32) -> (i32, i32) {
    %c0_i32 = arith.constant 0 : i32
    %c0_i32_0 = arith.constant 0 : i32
    %c0_i32_1 = arith.constant 0 : i32
    return %c0_i32, %c0_i32_0 : i32, i32
  }
  func.func @transform_13(%arg0: i32) -> (i32, i32) {
    %c0_i32 = arith.constant 0 : i32
    %c0_i32_0 = arith.constant 0 : i32
    return %arg0, %c0_i32 : i32, i32
  }
}

</mosaic_0001>

<llo_original>
// kernel: tpu_custom_call.1
$region0: #{tpu_custom_call.1}
  #allocation0 [shape = 'u32[]', space=smem, size = 0x4, offset = 0x4, fixed_abs, tag = 'smem constant byte address 0x4 - core index']
  #allocation1 [shape = 'u32[144,128]{1,0:T(1,128)}', space=vmem, size = 0x12000, scoped, tag = 'internal scratch']
  %s0 = inlined_call_operand.hbm [shape: f32[8,16], index: 0, kind: input, shape index: {}]
  %s1 = inlined_call_operand.hbm [shape: bf16[16,128], index: 1, kind: input, shape index: {}]
  %s2 = inlined_call_operand.vmem [shape: f32[1,128], index: 2, kind: input, shape index: {}]
  %s3 = inlined_call_operand.vmem [shape: f32[2,1,128], index: 3, kind: input, shape index: {}]
  %s4 = inlined_call_operand.vmem [shape: f32[2,1,128], index: 4, kind: input, shape index: {}]
  %s5 = inlined_call_operand.hbm [shape: bf16[2,128,128], index: 5, kind: input, shape index: {}]
  %s6 = inlined_call_operand.vmem [shape: f32[2,1,128], index: 6, kind: input, shape index: {}]
  %s7 = inlined_call_operand.hbm [shape: bf16[2,128,128], index: 7, kind: input, shape index: {}]
  %s8 = inlined_call_operand.vmem [shape: f32[2,1,128], index: 8, kind: input, shape index: {}]
  %s9 = inlined_call_operand.vmem [shape: f32[1,128], index: 9, kind: input, shape index: {}]
  %s10 = inlined_call_operand.vmem [shape: f32[1,128], index: 10, kind: input, shape index: {}]
  %s11 = inlined_call_operand.hbm [shape: bf16[128,128], index: 11, kind: input, shape index: {}]
  %s12 = inlined_call_operand.vmem [shape: f32[1,128], index: 12, kind: input, shape index: {}]
  %s13 = inlined_call_operand.hbm [shape: f32[8,128], index: 13, kind: output, shape index: {}]
  %s14 = sld [smem:[#allocation0]]
  $region82: #{tpu_custom_call.1} parent=0
    _
  %s16 = ssub.s32 1, %s14
  %s17 = scalar_select 0, %s16, %s14
  $region1: #{tpu_custom_call.1} parent=0
    #allocation2 [shape = 'u8[4096]{0}', space=vmem, size = 0x1000, scoped, tag = 'input window, operand 0, single buffered']
    #allocation3 [shape = 's32[1]{0}', space=sflag, size = 0x4, scoped, tag = 'scoped memory for tpu_custom_call.1']
    #allocation4 [shape = 's32[1]{0}', space=sflag, size = 0x4, scoped, tag = 'scoped memory for tpu_custom_call.1']
    #allocation5 [shape = 'u8[4096]{0}', space=vmem, size = 0x1000, scoped, tag = 'input window, operand 1, single buffered']
    #allocation6 [shape = 's32[1]{0}', space=sflag, size = 0x4, scoped, tag = 'scoped memory for tpu_custom_call.1']
    #allocation7 [shape = 'u8[65536]{0}', space=vmem, size = 0x10000, scoped, tag = 'input window, operand 5, single buffered']
    #allocation8 [shape = 'u8[65536]{0}', space=vmem, size = 0x10000, scoped, tag = 'input window, operand 7, single buffered']
    #allocation9 [shape = 's32[1]{0}', space=sflag, size = 0x4, scoped, tag = 'scoped memory for tpu_custom_call.1']
    #allocation10 [shape = 'u8[32768]{0}', space=vmem, size = 0x8000, scoped, tag = 'input window, operand 11, single buffered']
    #allocation11 [shape = 'u8[4096]{0}', space=vmem, size = 0x1000, scoped, tag = 'output window, operand 0, single buffered']
    %18 = vsyncpa [#allocation3], 0
    %19 = vsyncpa [#allocation6], 0
    %20 = vsyncpa [#allocation9], 0
    %21 = vsyncpa [#allocation4], 0
    // Predicated region
    $region2: #{tpu_custom_call.1} parent=1 // pred_check
      _
    $region3: #{tpu_custom_call.1} parent=1 // pred_check_branch
      %23 = sbr.rel (0) target = $region5
    $region4: #{tpu_custom_call.1} parent=1 // pred_region
      %s25 = ssub.s32 128, 128
      %26 = vsyncadd [#allocation3], %s25
      %s28 = sshll.u32 [#allocation2], 4
      %s29 = int_to_ptr.vmem [resolvable:$true] %s28
      %31 = dma.hbm_to_vmem [thread:$0]  %s0, 128, %s29, [#allocation3]
    $region5: #{tpu_custom_call.1} parent=1 // pred_fallthru
      _
    // Predicated region
    $region6: #{tpu_custom_call.1} parent=1 // pred_check
      _
    $region7: #{tpu_custom_call.1} parent=1 // pred_check_branch
      %33 = sbr.rel (0) target = $region9
    $region8: #{tpu_custom_call.1} parent=1 // pred_region
      %s35 = ssub.s32 128, 128
      %36 = vsyncadd [#allocation6], %s35
      %s37 = sshll.u32 [#allocation5], 4
      %s38 = int_to_ptr.vmem [resolvable:$true] %s37
      %43 = dma.hbm_to_vmem [thread:$0]  %s1, 128, %s38, [#allocation6], 64, 64, 4
    $region9: #{tpu_custom_call.1} parent=1 // pred_fallthru
      _
    // Predicated region
    $region10: #{tpu_custom_call.1} parent=1 // pred_check
      _
    $region11: #{tpu_custom_call.1} parent=1 // pred_check_branch
      %45 = sbr.rel (0) target = $region13
    $region12: #{tpu_custom_call.1} parent=1 // pred_region
      _
    $region13: #{tpu_custom_call.1} parent=1 // pred_fallthru
      _
    // Predicated region
    $region14: #{tpu_custom_call.1} parent=1 // pred_check
      _
    $region15: #{tpu_custom_call.1} parent=1 // pred_check_branch
      %47 = sbr.rel (0) target = $region17
    $region16: #{tpu_custom_call.1} parent=1 // pred_region
      _
    $region17: #{tpu_custom_call.1} parent=1 // pred_fallthru
      _
    // Predicated region
    $region18: #{tpu_custom_call.1} parent=1 // pred_check
      _
    $region19: #{tpu_custom_call.1} parent=1 // pred_check_branch
      %49 = sbr.rel (0) target = $region21
    $region20: #{tpu_custom_call.1} parent=1 // pred_region
      _
    $region21: #{tpu_custom_call.1} parent=1 // pred_fallthru
      _
    // Predicated region
    $region22: #{tpu_custom_call.1} parent=1 // pred_check
      _
    $region23: #{tpu_custom_call.1} parent=1 // pred_check_branch
      %51 = sbr.rel (0) target = $region25
    $region24: #{tpu_custom_call.1} parent=1 // pred_region
      %s53 = ssub.s32 2048, 2048
      %54 = vsyncadd [#allocation6], %s53
      %s55 = sshll.u32 [#allocation7], 4
      %s56 = int_to_ptr.vmem [resolvable:$true] %s55
      %61 = dma.hbm_to_vmem [thread:$0]  %s5, 2048, %s56, [#allocation6], 64, 64, 4
    $region25: #{tpu_custom_call.1} parent=1 // pred_fallthru
      _
    // Predicated region
    $region26: #{tpu_custom_call.1} parent=1 // pred_check
      _
    $region27: #{tpu_custom_call.1} parent=1 // pred_check_branch
      %63 = sbr.rel (0) target = $region29
    $region28: #{tpu_custom_call.1} parent=1 // pred_region
      _
    $region29: #{tpu_custom_call.1} parent=1 // pred_fallthru
      _
    // Predicated region
    $region30: #{tpu_custom_call.1} parent=1 // pred_check
      _
    $region31: #{tpu_custom_call.1} parent=1 // pred_check_branch
      %65 = sbr.rel (0) target = $region33
    $region32: #{tpu_custom_call.1} parent=1 // pred_region
      %s67 = ssub.s32 2048, 2048
      %68 = vsyncadd [#allocation9], %s67
      %s69 = sshll.u32 [#allocation8], 4
      %s70 = int_to_ptr.vmem [resolvable:$true] %s69
      %75 = dma.hbm_to_vmem [thread:$0]  %s7, 2048, %s70, [#allocation9], 64, 64, 4
    $region33: #{tpu_custom_call.1} parent=1 // pred_fallthru
      _
    // Predicated region
    $region34: #{tpu_custom_call.1} parent=1 // pred_check
      _
    $region35: #{tpu_custom_call.1} parent=1 // pred_check_branch
      %77 = sbr.rel (0) target = $region37
    $region36: #{tpu_custom_call.1} parent=1 // pred_region
      _
    $region37: #{tpu_custom_call.1} parent=1 // pred_fallthru
      _
    // Predicated region
    $region38: #{tpu_custom_call.1} parent=1 // pred_check
      _
    $region39: #{tpu_custom_call.1} parent=1 // pred_check_branch
      %79 = sbr.rel (0) target = $region41
    $region40: #{tpu_custom_call.1} parent=1 // pred_region
      _
    $region41: #{tpu_custom_call.1} parent=1 // pred_fallthru
      _
    // Predicated region
    $region42: #{tpu_custom_call.1} parent=1 // pred_check
      _
    $region43: #{tpu_custom_call.1} parent=1 // pred_check_branch
      %81 = sbr.rel (0) target = $region45
    $region44: #{tpu_custom_call.1} parent=1 // pred_region
      _
    $region45: #{tpu_custom_call.1} parent=1 // pred_fallthru
      _
    // Predicated region
    $region46: #{tpu_custom_call.1} parent=1 // pred_check
      _
    $region47: #{tpu_custom_call.1} parent=1 // pred_check_branch
      %83 = sbr.rel (0) target = $region49
    $region48: #{tpu_custom_call.1} parent=1 // pred_region
      %s85 = ssub.s32 1024, 1024
      %86 = vsyncadd [#allocation9], %s85
      %s87 = sshll.u32 [#allocation10], 4
      %s88 = int_to_ptr.vmem [resolvable:$true] %s87
      %93 = dma.hbm_to_vmem [thread:$0]  %s11, 1024, %s88, [#allocation9], 64, 64, 4
    $region49: #{tpu_custom_call.1} parent=1 // pred_fallthru
      _
    // Predicated region
    $region50: #{tpu_custom_call.1} parent=1 // pred_check
      _
    $region51: #{tpu_custom_call.1} parent=1 // pred_check_branch
      %95 = sbr.rel (0) target = $region53
    $region52: #{tpu_custom_call.1} parent=1 // pred_region
      _
    $region53: #{tpu_custom_call.1} parent=1 // pred_fallthru
      _
    // Predicated region
    $region54: #{tpu_custom_call.1} parent=1 // pred_check
      _
    $region55: #{tpu_custom_call.1} parent=1 // pred_check_branch
      %97 = sbr.rel (0) target = $region57
    $region56: #{tpu_custom_call.1} parent=1 // pred_region
      %98 = dma.done [#allocation3], 128
    $region57: #{tpu_custom_call.1} parent=1 // pred_fallthru
      _
    // Predicated region
    $region58: #{tpu_custom_call.1} parent=1 // pred_check
      _
    $region59: #{tpu_custom_call.1} parent=1 // pred_check_branch
      %100 = sbr.rel (0) target = $region61
    $region60: #{tpu_custom_call.1} parent=1 // pred_region
      %101 = dma.done [#allocation6], 128
    $region61: #{tpu_custom_call.1} parent=1 // pred_fallthru
      _
    // Predicated region
    $region62: #{tpu_custom_call.1} parent=1 // pred_check
      _
    $region63: #{tpu_custom_call.1} parent=1 // pred_check_branch
      %103 = sbr.rel (0) target = $region65
    $region64: #{tpu_custom_call.1} parent=1 // pred_region
      %104 = dma.done [#allocation6], 2048
    $region65: #{tpu_custom_call.1} parent=1 // pred_fallthru
      _
    // Predicated region
    $region66: #{tpu_custom_call.1} parent=1 // pred_check
      _
    $region67: #{tpu_custom_call.1} parent=1 // pred_check_branch
      %106 = sbr.rel (0) target = $region69
    $region68: #{tpu_custom_call.1} parent=1 // pred_region
      %107 = dma.done [#allocation9], 2048
    $region69: #{tpu_custom_call.1} parent=1 // pred_fallthru
      _
    // Predicated region
    $region70: #{tpu_custom_call.1} parent=1 // pred_check
      _
    $region71: #{tpu_custom_call.1} parent=1 // pred_check_branch
      %109 = sbr.rel (0) target = $region73
    $region72: #{tpu_custom_call.1} parent=1 // pred_region
      %110 = dma.done [#allocation9], 1024
    $region73: #{tpu_custom_call.1} parent=1 // pred_fallthru
      _
    %v112 = vlaneseq
    %v113 = vand.u32 %v112, 127
    %vm114 = vcmp.lt.s32.totalorder %v113, 32
    %v115 = vsel %vm114, 1, 0
    %v116 = vcvt.s32.f32 %v115
    %v117 = vld [vmem:[#allocation2] sm:$0xff]
    %v118 = vpack.c.bf16 %v117, %v117
    %v119 = vld [vmem:[#allocation5] sm:$0xf]
    %v120 = vld [vmem:[#allocation5 + $0x4] sm:$0xf]
    %v121 = vld [vmem:[%s2] sm:$0x1]
    %v123 = vlaneseq
    %v124 = vshrl.u32 %v123, 7
    %v125 = vsub.s32 0, %v124
    %v126 = vrot.slane %v121, %v125
    %v130 = vunpack.c.l.b16 %v119
    %v131 = vunpack.c.l.b16 %v120
    %v132 = vpack.c.b16 %v131, %v130
    %vm134 = vcmask 130048
    %v136 = vsel %vm134, %v118, 0
    %138 = vmatprep.subr.bf16.mxu0 0
    %139 = vmatpush1.bf16.msra.mxu0 0
    %140 = vmatprep.subr.bf16.mxu0 0
    %141 = vmatpush1.bf16.msra.mxu0 0
    %142 = vmatprep.subr.bf16.mxu0 0
    %143 = vmatpush1.bf16.msra.mxu0 0
    %144 = vmatprep.subr.bf16.mxu0 0
    %145 = vmatpush1.bf16.msra.mxu0 0
    %146 = vmatprep.subr.bf16.mxu0 0
    %147 = vmatpush1.bf16.msra.mxu0 0
    %148 = vmatprep.subr.bf16.mxu0 0
    %149 = vmatpush1.bf16.msra.mxu0 0
    %150 = vmatprep.subr.bf16.mxu0 0
    %151 = vmatpush1.bf16.msra.mxu0 0
    %152 = vmatprep.subr.bf16.mxu0 0
    %153 = vmatpush1.bf16.msra.mxu0 %v132
    %154 = vmatprep.subr.bf16.mxu0 0
    %155 = vmatpush2.bf16.msra.mxu0 0
    %156 = vmatprep.subr.bf16.mxu0 0
    %157 = vmatpush2.bf16.msra.mxu0 0
    %158 = vmatprep.subr.bf16.mxu0 0
    %159 = vmatpush2.bf16.msra.mxu0 0
    %160 = vmatprep.subr.bf16.mxu0 0
    %161 = vmatpush2.bf16.msra.mxu0 0
    %162 = vmatprep.subr.bf16.mxu0 0
    %163 = vmatpush2.bf16.msra.mxu0 0
    %164 = vmatprep.subr.bf16.mxu0 0
    %165 = vmatpush2.bf16.msra.mxu0 0
    %166 = vmatprep.subr.bf16.mxu0 0
    %167 = vmatpush2.bf16.msra.mxu0 0
    %168 = vmatprep.subr.bf16.mxu0 0
    %169 = vmatpush2.bf16.msra.mxu0 0
    %170 = vmatprep.mubr.bf16.mxu0 0
    %171 = vmatmul.mubr.bf16.gmra.mxu0 %v136
    %v172 = vpop.f32.mrf.mxu0
    %v173 = vadd.f32 %v126, %v172
    %v174 = vpop.f32.mrf.mxu0
    %v175 = vpop.f32.mrf.mxu0
    %v176 = vpop.f32.mrf.mxu0
    %177 = vdwg.mxu0
    %v178 = vld [vmem:[%s3] sm:$0x1]
    %v179 = vld [vmem:[%s4] sm:$0x1]
    %v180 = vld [vmem:[#allocation7] sm:$0xf]
    %v181 = vld [vmem:[#allocation7 + $0x4] sm:$0xf]
    %v182 = vld [vmem:[#allocation7 + $0x8] sm:$0xf]
    %v183 = vld [vmem:[#allocation7 + $0xc] sm:$0xf]
    %v184 = vld [vmem:[#allocation7 + $0x10] sm:$0xf]
    %v185 = vld [vmem:[#allocation7 + $0x14] sm:$0xf]
    %v186 = vld [vmem:[#allocation7 + $0x18] sm:$0xf]
    %v187 = vld [vmem:[#allocation7 + $0x1c] sm:$0xf]
    %v188 = vld [vmem:[#allocation7 + $0x20] sm:$0xf]
    %v189 = vld [vmem:[#allocation7 + $0x24] sm:$0xf]
    %v190 = vld [vmem:[#allocation7 + $0x28] sm:$0xf]
    %v191 = vld [vmem:[#allocation7 + $0x2c] sm:$0xf]
    %v192 = vld [vmem:[#allocation7 + $0x30] sm:$0xf]
    %v193 = vld [vmem:[#allocation7 + $0x34] sm:$0xf]
    %v194 = vld [vmem:[#allocation7 + $0x38] sm:$0xf]
    %v195 = vld [vmem:[#allocation7 + $0x3c] sm:$0xf]
    %v196 = vld [vmem:[%s6] sm:$0x1]
    %v197 = vld [vmem:[#allocation8] sm:$0xf]
    %v198 = vld [vmem:[#allocation8 + $0x4] sm:$0xf]
    %v199 = vld [vmem:[#allocation8 + $0x8] sm:$0xf]
    %v200 = vld [vmem:[#allocation8 + $0xc] sm:$0xf]
    %v201 = vld [vmem:[#allocation8 + $0x10] sm:$0xf]
    %v202 = vld [vmem:[#allocation8 + $0x14] sm:$0xf]
    %v203 = vld [vmem:[#allocation8 + $0x18] sm:$0xf]
    %v204 = vld [vmem:[#allocation8 + $0x1c] sm:$0xf]
    %v205 = vld [vmem:[#allocation8 + $0x20] sm:$0xf]
    %v206 = vld [vmem:[#allocation8 + $0x24] sm:$0xf]
    %v207 = vld [vmem:[#allocation8 + $0x28] sm:$0xf]
    %v208 = vld [vmem:[#allocation8 + $0x2c] sm:$0xf]
    %v209 = vld [vmem:[#allocation8 + $0x30] sm:$0xf]
    %v210 = vld [vmem:[#allocation8 + $0x34] sm:$0xf]
    %v211 = vld [vmem:[#allocation8 + $0x38] sm:$0xf]
    %v212 = vld [vmem:[#allocation8 + $0x3c] sm:$0xf]
    %v213 = vld [vmem:[%s8] sm:$0x1]
    %214 = vadd.xlane.f32.xlu0 %v173
    %v215 = vpop.xlane.xlu0 %214
    %v216 = vmul.f32 %v215, 0.03125
    %v217 = vsub.f32 %v173, %v216
    %v218 = vmul.f32 %v217, %v116
    %v219 = vmul.f32 %v218, %v218
    %220 = vadd.xlane.f32.xlu0 %v219
    %v221 = vpop.xlane.xlu0 %220
    %v222 = vmul.f32 %v221, 0.03125
    %v223 = vadd.f32 %v222, 1e-05
    %v224 = vrsqrt.pop %v223
    %v225 = vmul.f32 %v218, %v224
    %v227 = vlaneseq
    %v228 = vshrl.u32 %v227, 7
    %v229 = vsub.s32 0, %v228
    %v230 = vrot.slane %v178, %v229
    %v232 = vmul.f32 %v225, %v230
    %v234 = vlaneseq
    %v235 = vshrl.u32 %v234, 7
    %v236 = vsub.s32 0, %v235
    %v237 = vrot.slane %v179, %v236
    %v239 = vadd.f32 %v232, %v237
    %v240 = vpack.c.bf16 %v239, %v239
    %v242 = vlaneseq
    %v243 = vshrl.u32 %v242, 7
    %v244 = vsub.s32 0, %v243
    %v245 = vrot.slane %v196, %v244
    %v263 = vunpack.c.l.b16 %v180
    %v264 = vunpack.c.l.b16 %v181
    %v265 = vunpack.c.l.b16 %v182
    %v266 = vunpack.c.l.b16 %v183
    %v267 = vunpack.c.l.b16 %v184
    %v268 = vunpack.c.l.b16 %v185
    %v269 = vunpack.c.l.b16 %v186
    %v270 = vunpack.c.l.b16 %v187
    %v271 = vunpack.c.l.b16 %v188
    %v272 = vunpack.c.l.b16 %v189
    %v273 = vunpack.c.l.b16 %v190
    %v274 = vunpack.c.l.b16 %v191
    %v275 = vunpack.c.l.b16 %v192
    %v276 = vunpack.c.l.b16 %v193
    %v277 = vunpack.c.l.b16 %v194
    %v278 = vunpack.c.l.b16 %v195
    %v279 = vpack.c.b16 %v264, %v263
    %v280 = vpack.c.b16 %v266, %v265
    %v281 = vpack.c.b16 %v268, %v267
    %v282 = vpack.c.b16 %v270, %v269
    %v283 = vpack.c.b16 %v272, %v271
    %v284 = vpack.c.b16 %v274, %v273
    %v285 = vpack.c.b16 %v276, %v275
    %v286 = vpack.c.b16 %v278, %v277
    %295 = vmatprep.subr.bf16.mxu0 0
    %296 = vmatpush1.bf16.msra.mxu0 %v286
    %297 = vmatprep.subr.bf16.mxu0 0
    %298 = vmatpush1.bf16.msra.mxu0 %v285
    %299 = vmatprep.subr.bf16.mxu0 0
    %300 = vmatpush1.bf16.msra.mxu0 %v284
    %301 = vmatprep.subr.bf16.mxu0 0
    %302 = vmatpush1.bf16.msra.mxu0 %v283
    %303 = vmatprep.subr.bf16.mxu0 0
    %304 = vmatpush1.bf16.msra.mxu0 %v282
    %305 = vmatprep.subr.bf16.mxu0 0
    %306 = vmatpush1.bf16.msra.mxu0 %v281
    %307 = vmatprep.subr.bf16.mxu0 0
    %308 = vmatpush1.bf16.msra.mxu0 %v280
    %309 = vmatprep.subr.bf16.mxu0 0
    %310 = vmatpush1.bf16.msra.mxu0 %v279
    %311 = vmatprep.subr.bf16.mxu0 0
    %312 = vmatpush2.bf16.msra.mxu0 0
    %313 = vmatprep.subr.bf16.mxu0 0
    %314 = vmatpush2.bf16.msra.mxu0 0
    %315 = vmatprep.subr.bf16.mxu0 0
    %316 = vmatpush2.bf16.msra.mxu0 0
    %317 = vmatprep.subr.bf16.mxu0 0
    %318 = vmatpush2.bf16.msra.mxu0 0
    %319 = vmatprep.subr.bf16.mxu0 0
    %320 = vmatpush2.bf16.msra.mxu0 0
    %321 = vmatprep.subr.bf16.mxu0 0
    %322 = vmatpush2.bf16.msra.mxu0 0
    %323 = vmatprep.subr.bf16.mxu0 0
    %324 = vmatpush2.bf16.msra.mxu0 0
    %325 = vmatprep.subr.bf16.mxu0 0
    %326 = vmatpush2.bf16.msra.mxu0 0
    %327 = vmatprep.mubr.bf16.mxu0 0
    %328 = vmatmul.mubr.bf16.gmra.mxu0 %v240
    %v329 = vpop.f32.mrf.mxu0
    %v330 = vadd.f32 %v245, %v329
    %v331 = vpop.f32.mrf.mxu0
    %v332 = vpop.f32.mrf.mxu0
    %v333 = vpop.f32.mrf.mxu0
    %334 = vdwg.mxu0
    %v335 = vmax.f32 %v330, 0.0
    %v336 = vpack.c.bf16 %v335, %v335
    %v338 = vlaneseq
    %v339 = vshrl.u32 %v338, 7
    %v340 = vsub.s32 0, %v339
    %v341 = vrot.slane %v213, %v340
    %v359 = vunpack.c.l.b16 %v197
    %v360 = vunpack.c.l.b16 %v198
    %v361 = vunpack.c.l.b16 %v199
    %v362 = vunpack.c.l.b16 %v200
    %v363 = vunpack.c.l.b16 %v201
    %v364 = vunpack.c.l.b16 %v202
    %v365 = vunpack.c.l.b16 %v203
    %v366 = vunpack.c.l.b16 %v204
    %v367 = vunpack.c.l.b16 %v205
    %v368 = vunpack.c.l.b16 %v206
    %v369 = vunpack.c.l.b16 %v207
    %v370 = vunpack.c.l.b16 %v208
    %v371 = vunpack.c.l.b16 %v209
    %v372 = vunpack.c.l.b16 %v210
    %v373 = vunpack.c.l.b16 %v211
    %v374 = vunpack.c.l.b16 %v212
    %v375 = vpack.c.b16 %v360, %v359
    %v376 = vpack.c.b16 %v362, %v361
    %v377 = vpack.c.b16 %v364, %v363
    %v378 = vpack.c.b16 %v366, %v365
    %v379 = vpack.c.b16 %v368, %v367
    %v380 = vpack.c.b16 %v370, %v369
    %v381 = vpack.c.b16 %v372, %v371
    %v382 = vpack.c.b16 %v374, %v373
    %391 = vmatprep.subr.bf16.mxu0 0
    %392 = vmatpush1.bf16.msra.mxu0 %v382
    %393 = vmatprep.subr.bf16.mxu0 0
    %394 = vmatpush1.bf16.msra.mxu0 %v381
    %395 = vmatprep.subr.bf16.mxu0 0
    %396 = vmatpush1.bf16.msra.mxu0 %v380
    %397 = vmatprep.subr.bf16.mxu0 0
    %398 = vmatpush1.bf16.msra.mxu0 %v379
    %399 = vmatprep.subr.bf16.mxu0 0
    %400 = vmatpush1.bf16.msra.mxu0 %v378
    %401 = vmatprep.subr.bf16.mxu0 0
    %402 = vmatpush1.bf16.msra.mxu0 %v377
    %403 = vmatprep.subr.bf16.mxu0 0
    %404 = vmatpush1.bf16.msra.mxu0 %v376
    %405 = vmatprep.subr.bf16.mxu0 0
    %406 = vmatpush1.bf16.msra.mxu0 %v375
    %407 = vmatprep.subr.bf16.mxu0 0
    %408 = vmatpush2.bf16.msra.mxu0 0
    %409 = vmatprep.subr.bf16.mxu0 0
    %410 = vmatpush2.bf16.msra.mxu0 0
    %411 = vmatprep.subr.bf16.mxu0 0
    %412 = vmatpush2.bf16.msra.mxu0 0
    %413 = vmatprep.subr.bf16.mxu0 0
    %414 = vmatpush2.bf16.msra.mxu0 0
    %415 = vmatprep.subr.bf16.mxu0 0
    %416 = vmatpush2.bf16.msra.mxu0 0
    %417 = vmatprep.subr.bf16.mxu0 0
    %418 = vmatpush2.bf16.msra.mxu0 0
    %419 = vmatprep.subr.bf16.mxu0 0
    %420 = vmatpush2.bf16.msra.mxu0 0
    %421 = vmatprep.subr.bf16.mxu0 0
    %422 = vmatpush2.bf16.msra.mxu0 0
    %423 = vmatprep.mubr.bf16.mxu0 0
    %424 = vmatmul.mubr.bf16.gmra.mxu0 %v336
    %v425 = vpop.f32.mrf.mxu0
    %v426 = vadd.f32 %v341, %v425
    %v427 = vpop.f32.mrf.mxu0
    %v428 = vpop.f32.mrf.mxu0
    %v429 = vpop.f32.mrf.mxu0
    %430 = vdwg.mxu0
    %v431 = vadd.f32 %v173, %v426
    %s432 = scalar_lea.vmem %s3, 1
    %v433 = vld [vmem:[%s432] sm:$0x1]
    %s434 = scalar_lea.vmem %s4, 1
    %v435 = vld [vmem:[%s434] sm:$0x1]
    %s436 = scalar_lea.vmem [#allocation7], 64
    %v437 = vld [vmem:[%s436] sm:$0xf]
    %v438 = vld [vmem:[%s436 + $0x4] sm:$0xf]
    %v439 = vld [vmem:[%s436 + $0x8] sm:$0xf]
    %v440 = vld [vmem:[%s436 + $0xc] sm:$0xf]
    %v441 = vld [vmem:[%s436 + $0x10] sm:$0xf]
    %v442 = vld [vmem:[%s436 + $0x14] sm:$0xf]
    %v443 = vld [vmem:[%s436 + $0x18] sm:$0xf]
    %v444 = vld [vmem:[%s436 + $0x1c] sm:$0xf]
    %v445 = vld [vmem:[%s436 + $0x20] sm:$0xf]
    %v446 = vld [vmem:[%s436 + $0x24] sm:$0xf]
    %v447 = vld [vmem:[%s436 + $0x28] sm:$0xf]
    %v448 = vld [vmem:[%s436 + $0x2c] sm:$0xf]
    %v449 = vld [vmem:[%s436 + $0x30] sm:$0xf]
    %v450 = vld [vmem:[%s436 + $0x34] sm:$0xf]
    %v451 = vld [vmem:[%s436 + $0x38] sm:$0xf]
    %v452 = vld [vmem:[%s436 + $0x3c] sm:$0xf]
    %s453 = scalar_lea.vmem %s6, 1
    %v454 = vld [vmem:[%s453] sm:$0x1]
    %s455 = scalar_lea.vmem [#allocation8], 64
    %v456 = vld [vmem:[%s455] sm:$0xf]
    %v457 = vld [vmem:[%s455 + $0x4] sm:$0xf]
    %v458 = vld [vmem:[%s455 + $0x8] sm:$0xf]
    %v459 = vld [vmem:[%s455 + $0xc] sm:$0xf]
    %v460 = vld [vmem:[%s455 + $0x10] sm:$0xf]
    %v461 = vld [vmem:[%s455 + $0x14] sm:$0xf]
    %v462 = vld [vmem:[%s455 + $0x18] sm:$0xf]
    %v463 = vld [vmem:[%s455 + $0x1c] sm:$0xf]
    %v464 = vld [vmem:[%s455 + $0x20] sm:$0xf]
    %v465 = vld [vmem:[%s455 + $0x24] sm:$0xf]
    %v466 = vld [vmem:[%s455 + $0x28] sm:$0xf]
    %v467 = vld [vmem:[%s455 + $0x2c] sm:$0xf]
    %v468 = vld [vmem:[%s455 + $0x30] sm:$0xf]
    %v469 = vld [vmem:[%s455 + $0x34] sm:$0xf]
    %v470 = vld [vmem:[%s455 + $0x38] sm:$0xf]
    %v471 = vld [vmem:[%s455 + $0x3c] sm:$0xf]
    %s472 = scalar_lea.vmem %s8, 1
    %v473 = vld [vmem:[%s472] sm:$0x1]
    %474 = vadd.xlane.f32.xlu0 %v431
    %v475 = vpop.xlane.xlu0 %474
    %v476 = vmul.f32 %v475, 0.03125
    %v477 = vsub.f32 %v431, %v476
    %v478 = vmul.f32 %v477, %v116
    %v479 = vmul.f32 %v478, %v478
    %480 = vadd.xlane.f32.xlu0 %v479
    %v481 = vpop.xlane.xlu0 %480
    %v482 = vmul.f32 %v481, 0.03125
    %v483 = vadd.f32 %v482, 1e-05
    %v484 = vrsqrt.pop %v483
    %v485 = vmul.f32 %v478, %v484
    %v487 = vlaneseq
    %v488 = vshrl.u32 %v487, 7
    %v489 = vsub.s32 0, %v488
    %v490 = vrot.slane %v433, %v489
    %v492 = vmul.f32 %v485, %v490
    %v494 = vlaneseq
    %v495 = vshrl.u32 %v494, 7
    %v496 = vsub.s32 0, %v495
    %v497 = vrot.slane %v435, %v496
    %v499 = vadd.f32 %v492, %v497
    %v500 = vpack.c.bf16 %v499, %v499
    %v502 = vlaneseq
    %v503 = vshrl.u32 %v502, 7
    %v504 = vsub.s32 0, %v503
    %v505 = vrot.slane %v454, %v504
    %v523 = vunpack.c.l.b16 %v437
    %v524 = vunpack.c.l.b16 %v438
    %v525 = vunpack.c.l.b16 %v439
    %v526 = vunpack.c.l.b16 %v440
    %v527 = vunpack.c.l.b16 %v441
    %v528 = vunpack.c.l.b16 %v442
    %v529 = vunpack.c.l.b16 %v443
    %v530 = vunpack.c.l.b16 %v444
    %v531 = vunpack.c.l.b16 %v445
    %v532 = vunpack.c.l.b16 %v446
    %v533 = vunpack.c.l.b16 %v447
    %v534 = vunpack.c.l.b16 %v448
    %v535 = vunpack.c.l.b16 %v449
    %v536 = vunpack.c.l.b16 %v450
    %v537 = vunpack.c.l.b16 %v451
    %v538 = vunpack.c.l.b16 %v452
    %v539 = vpack.c.b16 %v524, %v523
    %v540 = vpack.c.b16 %v526, %v525
    %v541 = vpack.c.b16 %v528, %v527
    %v542 = vpack.c.b16 %v530, %v529
    %v543 = vpack.c.b16 %v532, %v531
    %v544 = vpack.c.b16 %v534, %v533
    %v545 = vpack.c.b16 %v536, %v535
    %v546 = vpack.c.b16 %v538, %v537
    %555 = vmatprep.subr.bf16.mxu0 0
    %556 = vmatpush1.bf16.msra.mxu0 %v546
    %557 = vmatprep.subr.bf16.mxu0 0
    %558 = vmatpush1.bf16.msra.mxu0 %v545
    %559 = vmatprep.subr.bf16.mxu0 0
    %560 = vmatpush1.bf16.msra.mxu0 %v544
    %561 = vmatprep.subr.bf16.mxu0 0
    %562 = vmatpush1.bf16.msra.mxu0 %v543
    %563 = vmatprep.subr.bf16.mxu0 0
    %564 = vmatpush1.bf16.msra.mxu0 %v542
    %565 = vmatprep.subr.bf16.mxu0 0
    %566 = vmatpush1.bf16.msra.mxu0 %v541
    %567 = vmatprep.subr.bf16.mxu0 0
    %568 = vmatpush1.bf16.msra.mxu0 %v540
    %569 = vmatprep.subr.bf16.mxu0 0
    %570 = vmatpush1.bf16.msra.mxu0 %v539
    %571 = vmatprep.subr.bf16.mxu0 0
    %572 = vmatpush2.bf16.msra.mxu0 0
    %573 = vmatprep.subr.bf16.mxu0 0
    %574 = vmatpush2.bf16.msra.mxu0 0
    %575 = vmatprep.subr.bf16.mxu0 0
    %576 = vmatpush2.bf16.msra.mxu0 0
    %577 = vmatprep.subr.bf16.mxu0 0
    %578 = vmatpush2.bf16.msra.mxu0 0
    %579 = vmatprep.subr.bf16.mxu0 0
    %580 = vmatpush2.bf16.msra.mxu0 0
    %581 = vmatprep.subr.bf16.mxu0 0
    %582 = vmatpush2.bf16.msra.mxu0 0
    %583 = vmatprep.subr.bf16.mxu0 0
    %584 = vmatpush2.bf16.msra.mxu0 0
    %585 = vmatprep.subr.bf16.mxu0 0
    %586 = vmatpush2.bf16.msra.mxu0 0
    %587 = vmatprep.mubr.bf16.mxu0 0
    %588 = vmatmul.mubr.bf16.gmra.mxu0 %v500
    %v589 = vpop.f32.mrf.mxu0
    %v590 = vadd.f32 %v505, %v589
    %v591 = vpop.f32.mrf.mxu0
    %v592 = vpop.f32.mrf.mxu0
    %v593 = vpop.f32.mrf.mxu0
    %594 = vdwg.mxu0
    %v595 = vmax.f32 %v590, 0.0
    %v596 = vpack.c.bf16 %v595, %v595
    %v598 = vlaneseq
    %v599 = vshrl.u32 %v598, 7
    %v600 = vsub.s32 0, %v599
    %v601 = vrot.slane %v473, %v600
    %v619 = vunpack.c.l.b16 %v456
    %v620 = vunpack.c.l.b16 %v457
    %v621 = vunpack.c.l.b16 %v458
    %v622 = vunpack.c.l.b16 %v459
    %v623 = vunpack.c.l.b16 %v460
    %v624 = vunpack.c.l.b16 %v461
    %v625 = vunpack.c.l.b16 %v462
    %v626 = vunpack.c.l.b16 %v463
    %v627 = vunpack.c.l.b16 %v464
    %v628 = vunpack.c.l.b16 %v465
    %v629 = vunpack.c.l.b16 %v466
    %v630 = vunpack.c.l.b16 %v467
    %v631 = vunpack.c.l.b16 %v468
    %v632 = vunpack.c.l.b16 %v469
    %v633 = vunpack.c.l.b16 %v470
    %v634 = vunpack.c.l.b16 %v471
    %v635 = vpack.c.b16 %v620, %v619
    %v636 = vpack.c.b16 %v622, %v621
    %v637 = vpack.c.b16 %v624, %v623
    %v638 = vpack.c.b16 %v626, %v625
    %v639 = vpack.c.b16 %v628, %v627
    %v640 = vpack.c.b16 %v630, %v629
    %v641 = vpack.c.b16 %v632, %v631
    %v642 = vpack.c.b16 %v634, %v633
    %651 = vmatprep.subr.bf16.mxu0 0
    %652 = vmatpush1.bf16.msra.mxu0 %v642
    %653 = vmatprep.subr.bf16.mxu0 0
    %654 = vmatpush1.bf16.msra.mxu0 %v641
    %655 = vmatprep.subr.bf16.mxu0 0
    %656 = vmatpush1.bf16.msra.mxu0 %v640
    %657 = vmatprep.subr.bf16.mxu0 0
    %658 = vmatpush1.bf16.msra.mxu0 %v639
    %659 = vmatprep.subr.bf16.mxu0 0
    %660 = vmatpush1.bf16.msra.mxu0 %v638
    %661 = vmatprep.subr.bf16.mxu0 0
    %662 = vmatpush1.bf16.msra.mxu0 %v637
    %663 = vmatprep.subr.bf16.mxu0 0
    %664 = vmatpush1.bf16.msra.mxu0 %v636
    %665 = vmatprep.subr.bf16.mxu0 0
    %666 = vmatpush1.bf16.msra.mxu0 %v635
    %667 = vmatprep.subr.bf16.mxu0 0
    %668 = vmatpush2.bf16.msra.mxu0 0
    %669 = vmatprep.subr.bf16.mxu0 0
    %670 = vmatpush2.bf16.msra.mxu0 0
    %671 = vmatprep.subr.bf16.mxu0 0
    %672 = vmatpush2.bf16.msra.mxu0 0
    %673 = vmatprep.subr.bf16.mxu0 0
    %674 = vmatpush2.bf16.msra.mxu0 0
    %675 = vmatprep.subr.bf16.mxu0 0
    %676 = vmatpush2.bf16.msra.mxu0 0
    %677 = vmatprep.subr.bf16.mxu0 0
    %678 = vmatpush2.bf16.msra.mxu0 0
    %679 = vmatprep.subr.bf16.mxu0 0
    %680 = vmatpush2.bf16.msra.mxu0 0
    %681 = vmatprep.subr.bf16.mxu0 0
    %682 = vmatpush2.bf16.msra.mxu0 0
    %683 = vmatprep.mubr.bf16.mxu0 0
    %684 = vmatmul.mubr.bf16.gmra.mxu0 %v596
    %v685 = vpop.f32.mrf.mxu0
    %v686 = vadd.f32 %v601, %v685
    %v687 = vpop.f32.mrf.mxu0
    %v688 = vpop.f32.mrf.mxu0
    %v689 = vpop.f32.mrf.mxu0
    %690 = vdwg.mxu0
    %v691 = vadd.f32 %v431, %v686
    %v692 = vld [vmem:[%s9] sm:$0x1]
    %v693 = vld [vmem:[%s10] sm:$0x1]
    %694 = vadd.xlane.f32.xlu0 %v691
    %v695 = vpop.xlane.xlu0 %694
    %v696 = vmul.f32 %v695, 0.03125
    %v697 = vsub.f32 %v691, %v696
    %v698 = vmul.f32 %v697, %v116
    %v699 = vmul.f32 %v698, %v698
    %700 = vadd.xlane.f32.xlu0 %v699
    %v701 = vpop.xlane.xlu0 %700
    %v702 = vmul.f32 %v701, 0.03125
    %v703 = vadd.f32 %v702, 1e-05
    %v704 = vrsqrt.pop %v703
    %v705 = vmul.f32 %v698, %v704
    %v707 = vlaneseq
    %v708 = vshrl.u32 %v707, 7
    %v709 = vsub.s32 0, %v708
    %v710 = vrot.slane %v692, %v709
    %v712 = vmul.f32 %v705, %v710
    %v714 = vlaneseq
    %v715 = vshrl.u32 %v714, 7
    %v716 = vsub.s32 0, %v715
    %v717 = vrot.slane %v693, %v716
    %v719 = vadd.f32 %v712, %v717
    %v720 = vmax.f32 %v719, 0.0
    %v721 = vpack.c.bf16 %v720, %v720
    %v722 = vld [vmem:[#allocation10] sm:$0xf]
    %v723 = vld [vmem:[#allocation10 + $0x4] sm:$0xf]
    %v724 = vld [vmem:[#allocation10 + $0x8] sm:$0xf]
    %v725 = vld [vmem:[#allocation10 + $0xc] sm:$0xf]
    %v726 = vld [vmem:[#allocation10 + $0x10] sm:$0xf]
    %v727 = vld [vmem:[#allocation10 + $0x14] sm:$0xf]
    %v728 = vld [vmem:[#allocation10 + $0x18] sm:$0xf]
    %v729 = vld [vmem:[#allocation10 + $0x1c] sm:$0xf]
    %v730 = vld [vmem:[#allocation10 + $0x20] sm:$0xf]
    %v731 = vld [vmem:[#allocation10 + $0x24] sm:$0xf]
    %v732 = vld [vmem:[#allocation10 + $0x28] sm:$0xf]
    %v733 = vld [vmem:[#allocation10 + $0x2c] sm:$0xf]
    %v734 = vld [vmem:[#allocation10 + $0x30] sm:$0xf]
    %v735 = vld [vmem:[#allocation10 + $0x34] sm:$0xf]
    %v736 = vld [vmem:[#allocation10 + $0x38] sm:$0xf]
    %v737 = vld [vmem:[#allocation10 + $0x3c] sm:$0xf]
    %v754 = vunpack.c.l.b16 %v722
    %v755 = vunpack.c.l.b16 %v723
    %v756 = vunpack.c.l.b16 %v724
    %v757 = vunpack.c.l.b16 %v725
    %v758 = vunpack.c.l.b16 %v726
    %v759 = vunpack.c.l.b16 %v727
    %v760 = vunpack.c.l.b16 %v728
    %v761 = vunpack.c.l.b16 %v729
    %v762 = vunpack.c.l.b16 %v730
    %v763 = vunpack.c.l.b16 %v731
    %v764 = vunpack.c.l.b16 %v732
    %v765 = vunpack.c.l.b16 %v733
    %v766 = vunpack.c.l.b16 %v734
    %v767 = vunpack.c.l.b16 %v735
    %v768 = vunpack.c.l.b16 %v736
    %v769 = vunpack.c.l.b16 %v737
    %v770 = vpack.c.b16 %v755, %v754
    %v771 = vpack.c.b16 %v757, %v756
    %v772 = vpack.c.b16 %v759, %v758
    %v773 = vpack.c.b16 %v761, %v760
    %v774 = vpack.c.b16 %v763, %v762
    %v775 = vpack.c.b16 %v765, %v764
    %v776 = vpack.c.b16 %v767, %v766
    %v777 = vpack.c.b16 %v769, %v768
    %786 = vmatprep.subr.bf16.mxu0 0
    %787 = vmatpush1.bf16.msra.mxu0 %v777
    %788 = vmatprep.subr.bf16.mxu0 0
    %789 = vmatpush1.bf16.msra.mxu0 %v776
    %790 = vmatprep.subr.bf16.mxu0 0
    %791 = vmatpush1.bf16.msra.mxu0 %v775
    %792 = vmatprep.subr.bf16.mxu0 0
    %793 = vmatpush1.bf16.msra.mxu0 %v774
    %794 = vmatprep.subr.bf16.mxu0 0
    %795 = vmatpush1.bf16.msra.mxu0 %v773
    %796 = vmatprep.subr.bf16.mxu0 0
    %797 = vmatpush1.bf16.msra.mxu0 %v772
    %798 = vmatprep.subr.bf16.mxu0 0
    %799 = vmatpush1.bf16.msra.mxu0 %v771
    %800 = vmatprep.subr.bf16.mxu0 0
    %801 = vmatpush1.bf16.msra.mxu0 %v770
    %802 = vmatprep.subr.bf16.mxu0 0
    %803 = vmatpush2.bf16.msra.mxu0 0
    %804 = vmatprep.subr.bf16.mxu0 0
    %805 = vmatpush2.bf16.msra.mxu0 0
    %806 = vmatprep.subr.bf16.mxu0 0
    %807 = vmatpush2.bf16.msra.mxu0 0
    %808 = vmatprep.subr.bf16.mxu0 0
    %809 = vmatpush2.bf16.msra.mxu0 0
    %810 = vmatprep.subr.bf16.mxu0 0
    %811 = vmatpush2.bf16.msra.mxu0 0
    %812 = vmatprep.subr.bf16.mxu0 0
    %813 = vmatpush2.bf16.msra.mxu0 0
    %814 = vmatprep.subr.bf16.mxu0 0
    %815 = vmatpush2.bf16.msra.mxu0 0
    %816 = vmatprep.subr.bf16.mxu0 0
    %817 = vmatpush2.bf16.msra.mxu0 0
    %818 = vmatprep.mubr.bf16.mxu0 0
    %819 = vmatmul.mubr.bf16.gmra.mxu0 %v721
    %v820 = vpop.f32.mrf.mxu0
    %v821 = vadd.f32 0.0, %v820
    %v822 = vpop.f32.mrf.mxu0
    %v823 = vpop.f32.mrf.mxu0
    %v824 = vpop.f32.mrf.mxu0
    %825 = vdwg.mxu0
    %v826 = vadd.f32 %v720, %v821
    %v827 = vld [vmem:[%s12] sm:$0x1]
    %v829 = vlaneseq
    %v830 = vshrl.u32 %v829, 7
    %v831 = vsub.s32 0, %v830
    %v832 = vrot.slane %v827, %v831
    %v834 = vadd.f32 %v826, %v832
    %835 = vst [vmem:[#allocation11] sm:$0xff] %v834
    // Predicated region
    $region74: #{tpu_custom_call.1} parent=1 // pred_check
      _
    $region75: #{tpu_custom_call.1} parent=1 // pred_check_branch
      %837 = sbr.rel (0) target = $region77
    $region76: #{tpu_custom_call.1} parent=1 // pred_region
      %s839 = ssub.s32 128, 128
      %840 = vsyncadd [#allocation4], %s839
      %s842 = sshll.u32 [#allocation11], 4
      %s843 = int_to_ptr.vmem [resolvable:$true] %s842
      %845 = dma.vmem_to_hbm [thread:$0]  %s843, 128, %s13, [#allocation4]
    $region77: #{tpu_custom_call.1} parent=1 // pred_fallthru
      _
    // Predicated region
    $region78: #{tpu_custom_call.1} parent=1 // pred_check
      _
    $region79: #{tpu_custom_call.1} parent=1 // pred_check_branch
      %847 = sbr.rel (0) target = $region81
    $region80: #{tpu_custom_call.1} parent=1 // pred_region
      %848 = dma.done [#allocation4], 128
    $region81: #{tpu_custom_call.1} parent=1 // pred_fallthru
      _
    %849 = vsyncpa [#allocation3], 1
    %850 = vsyncpa [#allocation6], 1
    %851 = vsyncpa [#allocation9], 1
    %852 = vsyncpa [#allocation4], 1

// kernel: tpu_custom_call.1
$region0: #{tpu_custom_call.1}
  #allocation0 [shape = 'u32[]', space=smem, size = 0x4, offset = 0x4, fixed_abs, tag = 'smem constant byte address 0x4 - core index']
  #allocation1 [shape = 'u32[144,128]{1,0:T(1,128)}', space=vmem, size = 0x12000, scoped, tag = 'internal scratch']
  %s0 = inlined_call_operand.hbm [shape: f32[8,16], index: 0, kind: input, shape index: {}]
  %s1 = inlined_call_operand.hbm [shape: bf16[16,128], index: 1, kind: input, shape index: {}]
  %s2 = inlined_call_operand.vmem [shape: f32[1,128], index: 2, kind: input, shape index: {}]
  %s3 = inlined_call_operand.vmem [shape: f32[2,1,128], index: 3, kind: input, shape index: {}]
  %s4 = inlined_call_operand.vmem [shape: f32[2,1,128], index: 4, kind: input, shape index: {}]
  %s5 = inlined_call_operand.hbm [shape: bf16[2,128,128], index: 5, kind: input, shape index: {}]
  %s6 = inlined_call_operand.vmem [shape: f32[2,1,128], index: 6, kind: input, shape index: {}]
  %s7 = inlined_call_operand.hbm [shape: bf16[2,128,128], index: 7, kind: input, shape index: {}]
  %s8 = inlined_call_operand.vmem [shape: f32[2,1,128], index: 8, kind: input, shape index: {}]
  %s9 = inlined_call_operand.vmem [shape: f32[1,128], index: 9, kind: input, shape index: {}]
  %s10 = inlined_call_operand.vmem [shape: f32[1,128], index: 10, kind: input, shape index: {}]
  %s11 = inlined_call_operand.hbm [shape: bf16[128,128], index: 11, kind: input, shape index: {}]
  %s12 = inlined_call_operand.vmem [shape: f32[1,128], index: 12, kind: input, shape index: {}]
  %s13 = inlined_call_operand.hbm [shape: f32[8,128], index: 13, kind: output, shape index: {}]
  %s14 = sld [smem:[#allocation0]]
  $region82: #{tpu_custom_call.1} parent=0
    _
  %s16 = ssub.s32 1, %s14
  %s17 = scalar_select 0, %s16, %s14
  $region1: #{tpu_custom_call.1} parent=0
    #allocation2 [shape = 'u8[4096]{0}', space=vmem, size = 0x1000, scoped, tag = 'input window, operand 0, single buffered']
    #allocation3 [shape = 's32[1]{0}', space=sflag, size = 0x4, scoped, tag = 'scoped memory for tpu_custom_call.1']
    #allocation4 [shape = 's32[1]{0}', space=sflag, size = 0x4, scoped, tag = 'scoped memory for tpu_custom_call.1']
    #allocation5 [shape = 'u8[4096]{0}', space=vmem, size = 0x1000, scoped, tag = 'input window, operand 1, single buffered']
    #allocation6 [shape = 's32[1]{0}', space=sflag, size = 0x4, scoped, tag = 'scoped memory for tpu_custom_call.1']
    #allocation7 [shape = 'u8[65536]{0}', space=vmem, size = 0x10000, scoped, tag = 'input window, operand 5, single buffered']
    #allocation8 [shape = 'u8[65536]{0}', space=vmem, size = 0x10000, scoped, tag = 'input window, operand 7, single buffered']
    #allocation9 [shape = 's32[1]{0}', space=sflag, size = 0x4, scoped, tag = 'scoped memory for tpu_custom_call.1']
    #allocation10 [shape = 'u8[32768]{0}', space=vmem, size = 0x8000, scoped, tag = 'input window, operand 11, single buffered']
    #allocation11 [shape = 'u8[4096]{0}', space=vmem, size = 0x1000, scoped, tag = 'output window, operand 0, single buffered']
    %18 = vsyncpa [#allocation3], 0
    %19 = vsyncpa [#allocation6], 0
    %20 = vsyncpa [#allocation9], 0
    %21 = vsyncpa [#allocation4], 0
    // Predicated region
    $region2: #{tpu_custom_call.1} parent=1 // pred_check
      _
    $region3: #{tpu_custom_call.1} parent=1 // pred_check_branch
      %23 = sbr.rel (0) target = $region5
    $region4: #{tpu_custom_call.1} parent=1 // pred_region
      %s25 = ssub.s32 128, 128
      %26 = vsyncadd [#allocation3], %s25
      %s28 = sshll.u32 [#allocation2], 4
      %s29 = int_to_ptr.vmem [resolvable:$true] %s28
      %31 = dma.hbm_to_vmem [thread:$0]  %s0, 128, %s29, [#allocation3]
    $region5: #{tpu_custom_call.1} parent=1 // pred_fallthru
      _
    // Predicated region
    $region6: #{tpu_custom_call.1} parent=1 // pred_check
      _
    $region7: #{tpu_custom_call.1} parent=1 // pred_check_branch
      %33 = sbr.rel (0) target = $region9
    $region8: #{tpu_custom_call.1} parent=1 // pred_region
      %s35 = ssub.s32 128, 128
      %36 = vsyncadd [#allocation6], %s35
      %s37 = sshll.u32 [#allocation5], 4
      %s38 = int_to_ptr.vmem [resolvable:$true] %s37
      %43 = dma.hbm_to_vmem [thread:$0]  %s1, 128, %s38, [#allocation6], 64, 64, 4
    $region9: #{tpu_custom_call.1} parent=1 // pred_fallthru
      _
    // Predicated region
    $region10: #{tpu_custom_call.1} parent=1 // pred_check
      _
    $region11: #{tpu_custom_call.1} parent=1 // pred_check_branch
      %45 = sbr.rel (0) target = $region13
    $region12: #{tpu_custom_call.1} parent=1 // pred_region
      _
    $region13: #{tpu_custom_call.1} parent=1 // pred_fallthru
      _
    // Predicated region
    $region14: #{tpu_custom_call.1} parent=1 // pred_check
      _
    $region15: #{tpu_custom_call.1} parent=1 // pred_check_branch
      %47 = sbr.rel (0) target = $region17
    $region16: #{tpu_custom_call.1} parent=1 // pred_region
      _
    $region17: #{tpu_custom_call.1} parent=1 // pred_fallthru
      _
    // Predicated region
    $region18: #{tpu_custom_call.1} parent=1 // pred_check
      _
    $region19: #{tpu_custom_call.1} parent=1 // pred_check_branch
      %49 = sbr.rel (0) target = $region21
    $region20: #{tpu_custom_call.1} parent=1 // pred_region
      _
    $region21: #{tpu_custom_call.1} parent=1 // pred_fallthru
      _
    // Predicated region
    $region22: #{tpu_custom_call.1} parent=1 // pred_check
      _
    $region23: #{tpu_custom_call.1} parent=1 // pred_check_branch
      %51 = sbr.rel (0) target = $region25
    $region24: #{tpu_custom_call.1} parent=1 // pred_region
      %s53 = ssub.s32 2048, 2048
      %54 = vsyncadd [#allocation6], %s53
      %s55 = sshll.u32 [#allocation7], 4
      %s56 = int_to_ptr.vmem [resolvable:$true] %s55
      %61 = dma.hbm_to_vmem [thread:$0]  %s5, 2048, %s56, [#allocation6], 64, 64, 4
    $region25: #{tpu_custom_call.1} parent=1 // pred_fallthru
      _
    // Predicated region
    $region26: #{tpu_custom_call.1} parent=1 // pred_check
      _
    $region27: #{tpu_custom_call.1} parent=1 // pred_check_branch
      %63 = sbr.rel (0) target = $region29
    $region28: #{tpu_custom_call.1} parent=1 // pred_region
      _
    $region29: #{tpu_custom_call.1} parent=1 // pred_fallthru
      _
    // Predicated region
    $region30: #{tpu_custom_call.1} parent=1 // pred_check
      _
    $region31: #{tpu_custom_call.1} parent=1 // pred_check_branch
      %65 = sbr.rel (0) target = $region33
    $region32: #{tpu_custom_call.1} parent=1 // pred_region
      %s67 = ssub.s32 2048, 2048
      %68 = vsyncadd [#allocation9], %s67
      %s69 = sshll.u32 [#allocation8], 4
      %s70 = int_to_ptr.vmem [resolvable:$true] %s69
      %75 = dma.hbm_to_vmem [thread:$0]  %s7, 2048, %s70, [#allocation9], 64, 64, 4
    $region33: #{tpu_custom_call.1} parent=1 // pred_fallthru
      _
    // Predicated region
    $region34: #{tpu_custom_call.1} parent=1 // pred_check
      _
    $region35: #{tpu_custom_call.1} parent=1 // pred_check_branch
      %77 = sbr.rel (0) target = $region37
    $region36: #{tpu_custom_call.1} parent=1 // pred_region
      _
    $region37: #{tpu_custom_call.1} parent=1 // pred_fallthru
      _
    // Predicated region
    $region38: #{tpu_custom_call.1} parent=1 // pred_check
      _
    $region39: #{tpu_custom_call.1} parent=1 // pred_check_branch
      %79 = sbr.rel (0) target = $region41
    $region40: #{tpu_custom_call.1} parent=1 // pred_region
      _
    $region41: #{tpu_custom_call.1} parent=1 // pred_fallthru
      _
    // Predicated region
    $region42: #{tpu_custom_call.1} parent=1 // pred_check
      _
    $region43: #{tpu_custom_call.1} parent=1 // pred_check_branch
      %81 = sbr.rel (0) target = $region45
    $region44: #{tpu_custom_call.1} parent=1 // pred_region
      _
    $region45: #{tpu_custom_call.1} parent=1 // pred_fallthru
      _
    // Predicated region
    $region46: #{tpu_custom_call.1} parent=1 // pred_check
      _
    $region47: #{tpu_custom_call.1} parent=1 // pred_check_branch
      %83 = sbr.rel (0) target = $region49
    $region48: #{tpu_custom_call.1} parent=1 // pred_region
      %s85 = ssub.s32 1024, 1024
      %86 = vsyncadd [#allocation9], %s85
      %s87 = sshll.u32 [#allocation10], 4
      %s88 = int_to_ptr.vmem [resolvable:$true] %s87
      %93 = dma.hbm_to_vmem [thread:$0]  %s11, 1024, %s88, [#allocation9], 64, 64, 4
    $region49: #{tpu_custom_call.1} parent=1 // pred_fallthru
      _
    // Predicated region
    $region50: #{tpu_custom_call.1} parent=1 // pred_check
      _
    $region51: #{tpu_custom_call.1} parent=1 // pred_check_branch
      %95 = sbr.rel (0) target = $region53
    $region52: #{tpu_custom_call.1} parent=1 // pred_region
      _
    $region53: #{tpu_custom_call.1} parent=1 // pred_fallthru
      _
    // Predicated region
    $region54: #{tpu_custom_call.1} parent=1 // pred_check
      _
    $region55: #{tpu_custom_call.1} parent=1 // pred_check_branch
      %97 = sbr.rel (0) target = $region57
    $region56: #{tpu_custom_call.1} parent=1 // pred_region
      %98 = dma.done [#allocation3], 128
    $region57: #{tpu_custom_call.1} parent=1 // pred_fallthru
      _
    // Predicated region
    $region58: #{tpu_custom_call.1} parent=1 // pred_check
      _
    $region59: #{tpu_custom_call.1} parent=1 // pred_check_branch
      %100 = sbr.rel (0) target = $region61
    $region60: #{tpu_custom_call.1} parent=1 // pred_region
      %101 = dma.done [#allocation6], 128
    $region61: #{tpu_custom_call.1} parent=1 // pred_fallthru
      _
    // Predicated region
    $region62: #{tpu_custom_call.1} parent=1 // pred_check
      _
    $region63: #{tpu_custom_call.1} parent=1 // pred_check_branch
      %103 = sbr.rel (0) target = $region65
    $region64: #{tpu_custom_call.1} parent=1 // pred_region
      %104 = dma.done [#allocation6], 2048
    $region65: #{tpu_custom_call.1} parent=1 // pred_fallthru
      _
    // Predicated region
    $region66: #{tpu_custom_call.1} parent=1 // pred_check
      _
    $region67: #{tpu_custom_call.1} parent=1 // pred_check_branch
      %106 = sbr.rel (0) target = $region69
    $region68: #{tpu_custom_call.1} parent=1 // pred_region
      %107 = dma.done [#allocation9], 2048
    $region69: #{tpu_custom_call.1} parent=1 // pred_fallthru
      _
    // Predicated region
    $region70: #{tpu_custom_call.1} parent=1 // pred_check
      _
    $region71: #{tpu_custom_call.1} parent=1 // pred_check_branch
      %109 = sbr.rel (0) target = $region73
    $region72: #{tpu_custom_call.1} parent=1 // pred_region
      %110 = dma.done [#allocation9], 1024
    $region73: #{tpu_custom_call.1} parent=1 // pred_fallthru
      _
    %v112 = vlaneseq
    %v113 = vand.u32 %v112, 127
    %vm114 = vcmp.lt.s32.totalorder %v113, 32
    %v115 = vsel %vm114, 1, 0
    %v116 = vcvt.s32.f32 %v115
    %v117 = vld [vmem:[#allocation2] sm:$0xff]
    %v118 = vpack.c.bf16 %v117, %v117
    %v119 = vld [vmem:[#allocation5] sm:$0xf]
    %v120 = vld [vmem:[#allocation5 + $0x4] sm:$0xf]
    %v121 = vld [vmem:[%s2] sm:$0x1]
    %v123 = vlaneseq
    %v124 = vshrl.u32 %v123, 7
    %v125 = vsub.s32 0, %v124
    %v126 = vrot.slane %v121, %v125
    %v130 = vunpack.c.l.b16 %v119
    %v131 = vunpack.c.l.b16 %v120
    %v132 = vpack.c.b16 %v131, %v130
    %vm134 = vcmask 130048
    %v136 = vsel %vm134, %v118, 0
    %138 = vmatprep.subr.bf16.mxu0 0
    %139 = vmatpush1.bf16.msra.mxu0 0
    %140 = vmatprep.subr.bf16.mxu0 0
    %141 = vmatpush1.bf16.msra.mxu0 0
    %142 = vmatprep.subr.bf16.mxu0 0
    %143 = vmatpush1.bf16.msra.mxu0 0
    %144 = vmatprep.subr.bf16.mxu0 0
    %145 = vmatpush1.bf16.msra.mxu0 0
    %146 = vmatprep.subr.bf16.mxu0 0
    %147 = vmatpush1.bf16.msra.mxu0 0
    %148 = vmatprep.subr.bf16.mxu0 0
    %149 = vmatpush1.bf16.msra.mxu0 0
    %150 = vmatprep.subr.bf16.mxu0 0
    %151 = vmatpush1.bf16.msra.mxu0 0
    %152 = vmatprep.subr.bf16.mxu0 0
    %153 = vmatpush1.bf16.msra.mxu0 %v132
    %154 = vmatprep.subr.bf16.mxu0 0
    %155 = vmatpush2.bf16.msra.mxu0 0
    %156 = vmatprep.subr.bf16.mxu0 0
    %157 = vmatpush2.bf16.msra.mxu0 0
    %158 = vmatprep.subr.bf16.mxu0 0
    %159 = vmatpush2.bf16.msra.mxu0 0
    %160 = vmatprep.subr.bf16.mxu0 0
    %161 = vmatpush2.bf16.msra.mxu0 0
    %162 = vmatprep.subr.bf16.mxu0 0
    %163 = vmatpush2.bf16.msra.mxu0 0
    %164 = vmatprep.subr.bf16.mxu0 0
    %165 = vmatpush2.bf16.msra.mxu0 0
    %166 = vmatprep.subr.bf16.mxu0 0
    %167 = vmatpush2.bf16.msra.mxu0 0
    %168 = vmatprep.subr.bf16.mxu0 0
    %169 = vmatpush2.bf16.msra.mxu0 0
    %170 = vmatprep.mubr.bf16.mxu0 0
    %171 = vmatmul.mubr.bf16.gmra.mxu0 %v136
    %v172 = vpop.f32.mrf.mxu0
    %v173 = vadd.f32 %v126, %v172
    %v174 = vpop.f32.mrf.mxu0
    %v175 = vpop.f32.mrf.mxu0
    %v176 = vpop.f32.mrf.mxu0
    %177 = vdwg.mxu0
    %v178 = vld [vmem:[%s3] sm:$0x1]
    %v179 = vld [vmem:[%s4] sm:$0x1]
    %v180 = vld [vmem:[#allocation7] sm:$0xf]
    %v181 = vld [vmem:[#allocation7 + $0x4] sm:$0xf]
    %v182 = vld [vmem:[#allocation7 + $0x8] sm:$0xf]
    %v183 = vld [vmem:[#allocation7 + $0xc] sm:$0xf]
    %v184 = vld [vmem:[#allocation7 + $0x10] sm:$0xf]
    %v185 = vld [vmem:[#allocation7 + $0x14] sm:$0xf]
    %v186 = vld [vmem:[#allocation7 + $0x18] sm:$0xf]
    %v187 = vld [vmem:[#allocation7 + $0x1c] sm:$0xf]
    %v188 = vld [vmem:[#allocation7 + $0x20] sm:$0xf]
    %v189 = vld [vmem:[#allocation7 + $0x24] sm:$0xf]
    %v190 = vld [vmem:[#allocation7 + $0x28] sm:$0xf]
    %v191 = vld [vmem:[#allocation7 + $0x2c] sm:$0xf]
    %v192 = vld [vmem:[#allocation7 + $0x30] sm:$0xf]
    %v193 = vld [vmem:[#allocation7 + $0x34] sm:$0xf]
    %v194 = vld [vmem:[#allocation7 + $0x38] sm:$0xf]
    %v195 = vld [vmem:[#allocation7 + $0x3c] sm:$0xf]
    %v196 = vld [vmem:[%s6] sm:$0x1]
    %v197 = vld [vmem:[#allocation8] sm:$0xf]
    %v198 = vld [vmem:[#allocation8 + $0x4] sm:$0xf]
    %v199 = vld [vmem:[#allocation8 + $0x8] sm:$0xf]
    %v200 = vld [vmem:[#allocation8 + $0xc] sm:$0xf]
    %v201 = vld [vmem:[#allocation8 + $0x10] sm:$0xf]
    %v202 = vld [vmem:[#allocation8 + $0x14] sm:$0xf]
    %v203 = vld [vmem:[#allocation8 + $0x18] sm:$0xf]
    %v204 = vld [vmem:[#allocation8 + $0x1c] sm:$0xf]
    %v205 = vld [vmem:[#allocation8 + $0x20] sm:$0xf]
    %v206 = vld [vmem:[#allocation8 + $0x24] sm:$0xf]
    %v207 = vld [vmem:[#allocation8 + $0x28] sm:$0xf]
    %v208 = vld [vmem:[#allocation8 + $0x2c] sm:$0xf]
    %v209 = vld [vmem:[#allocation8 + $0x30] sm:$0xf]
    %v210 = vld [vmem:[#allocation8 + $0x34] sm:$0xf]
    %v211 = vld [vmem:[#allocation8 + $0x38] sm:$0xf]
    %v212 = vld [vmem:[#allocation8 + $0x3c] sm:$0xf]
    %v213 = vld [vmem:[%s8] sm:$0x1]
    %214 = vadd.xlane.f32.xlu0 %v173
    %v215 = vpop.xlane.xlu0 %214
    %v216 = vmul.f32 %v215, 0.03125
    %v217 = vsub.f32 %v173, %v216
    %v218 = vmul.f32 %v217, %v116
    %v219 = vmul.f32 %v218, %v218
    %220 = vadd.xlane.f32.xlu0 %v219
    %v221 = vpop.xlane.xlu0 %220
    %v222 = vmul.f32 %v221, 0.03125
    %v223 = vadd.f32 %v222, 1e-05
    %v224 = vrsqrt.pop %v223
    %v225 = vmul.f32 %v218, %v224
    %v227 = vlaneseq
    %v228 = vshrl.u32 %v227, 7
    %v229 = vsub.s32 0, %v228
    %v230 = vrot.slane %v178, %v229
    %v232 = vmul.f32 %v225, %v230
    %v234 = vlaneseq
    %v235 = vshrl.u32 %v234, 7
    %v236 = vsub.s32 0, %v235
    %v237 = vrot.slane %v179, %v236
    %v239 = vadd.f32 %v232, %v237
    %v240 = vpack.c.bf16 %v239, %v239
    %v242 = vlaneseq
    %v243 = vshrl.u32 %v242, 7
    %v244 = vsub.s32 0, %v243
    %v245 = vrot.slane %v196, %v244
    %v263 = vunpack.c.l.b16 %v180
    %v264 = vunpack.c.l.b16 %v181
    %v265 = vunpack.c.l.b16 %v182
    %v266 = vunpack.c.l.b16 %v183
    %v267 = vunpack.c.l.b16 %v184
    %v268 = vunpack.c.l.b16 %v185
    %v269 = vunpack.c.l.b16 %v186
    %v270 = vunpack.c.l.b16 %v187
    %v271 = vunpack.c.l.b16 %v188
    %v272 = vunpack.c.l.b16 %v189
    %v273 = vunpack.c.l.b16 %v190
    %v274 = vunpack.c.l.b16 %v191
    %v275 = vunpack.c.l.b16 %v192
    %v276 = vunpack.c.l.b16 %v193
    %v277 = vunpack.c.l.b16 %v194
    %v278 = vunpack.c.l.b16 %v195
    %v279 = vpack.c.b16 %v264, %v263
    %v280 = vpack.c.b16 %v266, %v265
    %v281 = vpack.c.b16 %v268, %v267
    %v282 = vpack.c.b16 %v270, %v269
    %v283 = vpack.c.b16 %v272, %v271
    %v284 = vpack.c.b16 %v274, %v273
    %v285 = vpack.c.b16 %v276, %v275
    %v286 = vpack.c.b16 %v278, %v277
    %295 = vmatprep.subr.bf16.mxu0 0
    %296 = vmatpush1.bf16.msra.mxu0 %v286
    %297 = vmatprep.subr.bf16.mxu0 0
    %298 = vmatpush1.bf16.msra.mxu0 %v285
    %299 = vmatprep.subr.bf16.mxu0 0
    %300 = vmatpush1.bf16.msra.mxu0 %v284
    %301 = vmatprep.subr.bf16.mxu0 0
    %302 = vmatpush1.bf16.msra.mxu0 %v283
    %303 = vmatprep.subr.bf16.mxu0 0
    %304 = vmatpush1.bf16.msra.mxu0 %v282
    %305 = vmatprep.subr.bf16.mxu0 0
    %306 = vmatpush1.bf16.msra.mxu0 %v281
    %307 = vmatprep.subr.bf16.mxu0 0
    %308 = vmatpush1.bf16.msra.mxu0 %v280
    %309 = vmatprep.subr.bf16.mxu0 0
    %310 = vmatpush1.bf16.msra.mxu0 %v279
    %311 = vmatprep.subr.bf16.mxu0 0
    %312 = vmatpush2.bf16.msra.mxu0 0
    %313 = vmatprep.subr.bf16.mxu0 0
    %314 = vmatpush2.bf16.msra.mxu0 0
    %315 = vmatprep.subr.bf16.mxu0 0
    %316 = vmatpush2.bf16.msra.mxu0 0
    %317 = vmatprep.subr.bf16.mxu0 0
    %318 = vmatpush2.bf16.msra.mxu0 0
    %319 = vmatprep.subr.bf16.mxu0 0
    %320 = vmatpush2.bf16.msra.mxu0 0
    %321 = vmatprep.subr.bf16.mxu0 0
    %322 = vmatpush2.bf16.msra.mxu0 0
    %323 = vmatprep.subr.bf16.mxu0 0
    %324 = vmatpush2.bf16.msra.mxu0 0
    %325 = vmatprep.subr.bf16.mxu0 0
    %326 = vmatpush2.bf16.msra.mxu0 0
    %327 = vmatprep.mubr.bf16.mxu0 0
    %328 = vmatmul.mubr.bf16.gmra.mxu0 %v240
    %v329 = vpop.f32.mrf.mxu0
    %v330 = vadd.f32 %v245, %v329
    %v331 = vpop.f32.mrf.mxu0
    %v332 = vpop.f32.mrf.mxu0
    %v333 = vpop.f32.mrf.mxu0
    %334 = vdwg.mxu0
    %v335 = vmax.f32 %v330, 0.0
    %v336 = vpack.c.bf16 %v335, %v335
    %v338 = vlaneseq
    %v339 = vshrl.u32 %v338, 7
    %v340 = vsub.s32 0, %v339
    %v341 = vrot.slane %v213, %v340
    %v359 = vunpack.c.l.b16 %v197
    %v360 = vunpack.c.l.b16 %v198
    %v361 = vunpack.c.l.b16 %v199
    %v362 = vunpack.c.l.b16 %v200
    %v363 = vunpack.c.l.b16 %v201
    %v364 = vunpack.c.l.b16 %v202
    %v365 = vunpack.c.l.b16 %v203
    %v366 = vunpack.c.l.b16 %v204
    %v367 = vunpack.c.l.b16 %v205
    %v368 = vunpack.c.l.b16 %v206
    %v369 = vunpack.c.l.b16 %v207
    %v370 = vunpack.c.l.b16 %v208
    %v371 = vunpack.c.l.b16 %v209
    %v372 = vunpack.c.l.b16 %v210
    %v373 = vunpack.c.l.b16 %v211
    %v374 = vunpack.c.l.b16 %v212
    %v375 = vpack.c.b16 %v360, %v359
    %v376 = vpack.c.b16 %v362, %v361
    %v377 = vpack.c.b16 %v364, %v363
    %v378 = vpack.c.b16 %v366, %v365
    %v379 = vpack.c.b16 %v368, %v367
    %v380 = vpack.c.b16 %v370, %v369
    %v381 = vpack.c.b16 %v372, %v371
    %v382 = vpack.c.b16 %v374, %v373
    %391 = vmatprep.subr.bf16.mxu0 0
    %392 = vmatpush1.bf16.msra.mxu0 %v382
    %393 = vmatprep.subr.bf16.mxu0 0
    %394 = vmatpush1.bf16.msra.mxu0 %v381
    %395 = vmatprep.subr.bf16.mxu0 0
    %396 = vmatpush1.bf16.msra.mxu0 %v380
    %397 = vmatprep.subr.bf16.mxu0 0
    %398 = vmatpush1.bf16.msra.mxu0 %v379
    %399 = vmatprep.subr.bf16.mxu0 0
    %400 = vmatpush1.bf16.msra.mxu0 %v378
    %401 = vmatprep.subr.bf16.mxu0 0
    %402 = vmatpush1.bf16.msra.mxu0 %v377
    %403 = vmatprep.subr.bf16.mxu0 0
    %404 = vmatpush1.bf16.msra.mxu0 %v376
    %405 = vmatprep.subr.bf16.mxu0 0
    %406 = vmatpush1.bf16.msra.mxu0 %v375
    %407 = vmatprep.subr.bf16.mxu0 0
    %408 = vmatpush2.bf16.msra.mxu0 0
    %409 = vmatprep.subr.bf16.mxu0 0
    %410 = vmatpush2.bf16.msra.mxu0 0
    %411 = vmatprep.subr.bf16.mxu0 0
    %412 = vmatpush2.bf16.msra.mxu0 0
    %413 = vmatprep.subr.bf16.mxu0 0
    %414 = vmatpush2.bf16.msra.mxu0 0
    %415 = vmatprep.subr.bf16.mxu0 0
    %416 = vmatpush2.bf16.msra.mxu0 0
    %417 = vmatprep.subr.bf16.mxu0 0
    %418 = vmatpush2.bf16.msra.mxu0 0
    %419 = vmatprep.subr.bf16.mxu0 0
    %420 = vmatpush2.bf16.msra.mxu0 0
    %421 = vmatprep.subr.bf16.mxu0 0
    %422 = vmatpush2.bf16.msra.mxu0 0
    %423 = vmatprep.mubr.bf16.mxu0 0
    %424 = vmatmul.mubr.bf16.gmra.mxu0 %v336
    %v425 = vpop.f32.mrf.mxu0
    %v426 = vadd.f32 %v341, %v425
    %v427 = vpop.f32.mrf.mxu0
    %v428 = vpop.f32.mrf.mxu0
    %v429 = vpop.f32.mrf.mxu0
    %430 = vdwg.mxu0
    %v431 = vadd.f32 %v173, %v426
    %s432 = scalar_lea.vmem %s3, 1
    %v433 = vld [vmem:[%s432] sm:$0x1]
    %s434 = scalar_lea.vmem %s4, 1
    %v435 = vld [vmem:[%s434] sm:$0x1]
    %s436 = scalar_lea.vmem [#allocation7], 64
    %v437 = vld [vmem:[%s436] sm:$0xf]
    %v438 = vld [vmem:[%s436 + $0x4] sm:$0xf]
    %v439 = vld [vmem:[%s436 + $0x8] sm:$0xf]
    %v440 = vld [vmem:[%s436 + $0xc] sm:$0xf]
    %v441 = vld [vmem:[%s436 + $0x10] sm:$0xf]
    %v442 = vld [vmem:[%s436 + $0x14] sm:$0xf]
    %v443 = vld [vmem:[%s436 + $0x18] sm:$0xf]
    %v444 = vld [vmem:[%s436 + $0x1c] sm:$0xf]
    %v445 = vld [vmem:[%s436 + $0x20] sm:$0xf]
    %v446 = vld [vmem:[%s436 + $0x24] sm:$0xf]
    %v447 = vld [vmem:[%s436 + $0x28] sm:$0xf]
    %v448 = vld [vmem:[%s436 + $0x2c] sm:$0xf]
    %v449 = vld [vmem:[%s436 + $0x30] sm:$0xf]
    %v450 = vld [vmem:[%s436 + $0x34] sm:$0xf]
    %v451 = vld [vmem:[%s436 + $0x38] sm:$0xf]
    %v452 = vld [vmem:[%s436 + $0x3c] sm:$0xf]
    %s453 = scalar_lea.vmem %s6, 1
    %v454 = vld [vmem:[%s453] sm:$0x1]
    %s455 = scalar_lea.vmem [#allocation8], 64
    %v456 = vld [vmem:[%s455] sm:$0xf]
    %v457 = vld [vmem:[%s455 + $0x4] sm:$0xf]
    %v458 = vld [vmem:[%s455 + $0x8] sm:$0xf]
    %v459 = vld [vmem:[%s455 + $0xc] sm:$0xf]
    %v460 = vld [vmem:[%s455 + $0x10] sm:$0xf]
    %v461 = vld [vmem:[%s455 + $0x14] sm:$0xf]
    %v462 = vld [vmem:[%s455 + $0x18] sm:$0xf]
    %v463 = vld [vmem:[%s455 + $0x1c] sm:$0xf]
    %v464 = vld [vmem:[%s455 + $0x20] sm:$0xf]
    %v465 = vld [vmem:[%s455 + $0x24] sm:$0xf]
    %v466 = vld [vmem:[%s455 + $0x28] sm:$0xf]
    %v467 = vld [vmem:[%s455 + $0x2c] sm:$0xf]
    %v468 = vld [vmem:[%s455 + $0x30] sm:$0xf]
    %v469 = vld [vmem:[%s455 + $0x34] sm:$0xf]
    %v470 = vld [vmem:[%s455 + $0x38] sm:$0xf]
    %v471 = vld [vmem:[%s455 + $0x3c] sm:$0xf]
    %s472 = scalar_lea.vmem %s8, 1
    %v473 = vld [vmem:[%s472] sm:$0x1]
    %474 = vadd.xlane.f32.xlu0 %v431
    %v475 = vpop.xlane.xlu0 %474
    %v476 = vmul.f32 %v475, 0.03125
    %v477 = vsub.f32 %v431, %v476
    %v478 = vmul.f32 %v477, %v116
    %v479 = vmul.f32 %v478, %v478
    %480 = vadd.xlane.f32.xlu0 %v479
    %v481 = vpop.xlane.xlu0 %480
    %v482 = vmul.f32 %v481, 0.03125
    %v483 = vadd.f32 %v482, 1e-05
    %v484 = vrsqrt.pop %v483
    %v485 = vmul.f32 %v478, %v484
    %v487 = vlaneseq
    %v488 = vshrl.u32 %v487, 7
    %v489 = vsub.s32 0, %v488
    %v490 = vrot.slane %v433, %v489
    %v492 = vmul.f32 %v485, %v490
    %v494 = vlaneseq
    %v495 = vshrl.u32 %v494, 7
    %v496 = vsub.s32 0, %v495
    %v497 = vrot.slane %v435, %v496
    %v499 = vadd.f32 %v492, %v497
    %v500 = vpack.c.bf16 %v499, %v499
    %v502 = vlaneseq
    %v503 = vshrl.u32 %v502, 7
    %v504 = vsub.s32 0, %v503
    %v505 = vrot.slane %v454, %v504
    %v523 = vunpack.c.l.b16 %v437
    %v524 = vunpack.c.l.b16 %v438
    %v525 = vunpack.c.l.b16 %v439
    %v526 = vunpack.c.l.b16 %v440
    %v527 = vunpack.c.l.b16 %v441
    %v528 = vunpack.c.l.b16 %v442
    %v529 = vunpack.c.l.b16 %v443
    %v530 = vunpack.c.l.b16 %v444
    %v531 = vunpack.c.l.b16 %v445
    %v532 = vunpack.c.l.b16 %v446
    %v533 = vunpack.c.l.b16 %v447
    %v534 = vunpack.c.l.b16 %v448
    %v535 = vunpack.c.l.b16 %v449
    %v536 = vunpack.c.l.b16 %v450
    %v537 = vunpack.c.l.b16 %v451
    %v538 = vunpack.c.l.b16 %v452
    %v539 = vpack.c.b16 %v524, %v523
    %v540 = vpack.c.b16 %v526, %v525
    %v541 = vpack.c.b16 %v528, %v527
    %v542 = vpack.c.b16 %v530, %v529
    %v543 = vpack.c.b16 %v532, %v531
    %v544 = vpack.c.b16 %v534, %v533
    %v545 = vpack.c.b16 %v536, %v535
    %v546 = vpack.c.b16 %v538, %v537
    %555 = vmatprep.subr.bf16.mxu0 0
    %556 = vmatpush1.bf16.msra.mxu0 %v546
    %557 = vmatprep.subr.bf16.mxu0 0
    %558 = vmatpush1.bf16.msra.mxu0 %v545
    %559 = vmatprep.subr.bf16.mxu0 0
    %560 = vmatpush1.bf16.msra.mxu0 %v544
    %561 = vmatprep.subr.bf16.mxu0 0
    %562 = vmatpush1.bf16.msra.mxu0 %v543
    %563 = vmatprep.subr.bf16.mxu0 0
    %564 = vmatpush1.bf16.msra.mxu0 %v542
    %565 = vmatprep.subr.bf16.mxu0 0
    %566 = vmatpush1.bf16.msra.mxu0 %v541
    %567 = vmatprep.subr.bf16.mxu0 0
    %568 = vmatpush1.bf16.msra.mxu0 %v540
    %569 = vmatprep.subr.bf16.mxu0 0
    %570 = vmatpush1.bf16.msra.mxu0 %v539
    %571 = vmatprep.subr.bf16.mxu0 0
    %572 = vmatpush2.bf16.msra.mxu0 0
    %573 = vmatprep.subr.bf16.mxu0 0
    %574 = vmatpush2.bf16.msra.mxu0 0
    %575 = vmatprep.subr.bf16.mxu0 0
    %576 = vmatpush2.bf16.msra.mxu0 0
    %577 = vmatprep.subr.bf16.mxu0 0
    %578 = vmatpush2.bf16.msra.mxu0 0
    %579 = vmatprep.subr.bf16.mxu0 0
    %580 = vmatpush2.bf16.msra.mxu0 0
    %581 = vmatprep.subr.bf16.mxu0 0
    %582 = vmatpush2.bf16.msra.mxu0 0
    %583 = vmatprep.subr.bf16.mxu0 0
    %584 = vmatpush2.bf16.msra.mxu0 0
    %585 = vmatprep.subr.bf16.mxu0 0
    %586 = vmatpush2.bf16.msra.mxu0 0
    %587 = vmatprep.mubr.bf16.mxu0 0
    %588 = vmatmul.mubr.bf16.gmra.mxu0 %v500
    %v589 = vpop.f32.mrf.mxu0
    %v590 = vadd.f32 %v505, %v589
    %v591 = vpop.f32.mrf.mxu0
    %v592 = vpop.f32.mrf.mxu0
    %v593 = vpop.f32.mrf.mxu0
    %594 = vdwg.mxu0
    %v595 = vmax.f32 %v590, 0.0
    %v596 = vpack.c.bf16 %v595, %v595
    %v598 = vlaneseq
    %v599 = vshrl.u32 %v598, 7
    %v600 = vsub.s32 0, %v599
    %v601 = vrot.slane %v473, %v600
    %v619 = vunpack.c.l.b16 %v456
    %v620 = vunpack.c.l.b16 %v457
    %v621 = vunpack.c.l.b16 %v458
    %v622 = vunpack.c.l.b16 %v459
    %v623 = vunpack.c.l.b16 %v460
    %v624 = vunpack.c.l.b16 %v461
    %v625 = vunpack.c.l.b16 %v462
    %v626 = vunpack.c.l.b16 %v463
    %v627 = vunpack.c.l.b16 %v464
    %v628 = vunpack.c.l.b16 %v465
    %v629 = vunpack.c.l.b16 %v466
    %v630 = vunpack.c.l.b16 %v467
    %v631 = vunpack.c.l.b16 %v468
    %v632 = vunpack.c.l.b16 %v469
    %v633 = vunpack.c.l.b16 %v470
    %v634 = vunpack.c.l.b16 %v471
    %v635 = vpack.c.b16 %v620, %v619
    %v636 = vpack.c.b16 %v622, %v621
    %v637 = vpack.c.b16 %v624, %v623
    %v638 = vpack.c.b16 %v626, %v625
    %v639 = vpack.c.b16 %v628, %v627
    %v640 = vpack.c.b16 %v630, %v629
    %v641 = vpack.c.b16 %v632, %v631
    %v642 = vpack.c.b16 %v634, %v633
    %651 = vmatprep.subr.bf16.mxu0 0
    %652 = vmatpush1.bf16.msra.mxu0 %v642
    %653 = vmatprep.subr.bf16.mxu0 0
    %654 = vmatpush1.bf16.msra.mxu0 %v641
    %655 = vmatprep.subr.bf16.mxu0 0
    %656 = vmatpush1.bf16.msra.mxu0 %v640
    %657 = vmatprep.subr.bf16.mxu0 0
    %658 = vmatpush1.bf16.msra.mxu0 %v639
    %659 = vmatprep.subr.bf16.mxu0 0
    %660 = vmatpush1.bf16.msra.mxu0 %v638
    %661 = vmatprep.subr.bf16.mxu0 0
    %662 = vmatpush1.bf16.msra.mxu0 %v637
    %663 = vmatprep.subr.bf16.mxu0 0
    %664 = vmatpush1.bf16.msra.mxu0 %v636
    %665 = vmatprep.subr.bf16.mxu0 0
    %666 = vmatpush1.bf16.msra.mxu0 %v635
    %667 = vmatprep.subr.bf16.mxu0 0
    %668 = vmatpush2.bf16.msra.mxu0 0
    %669 = vmatprep.subr.bf16.mxu0 0
    %670 = vmatpush2.bf16.msra.mxu0 0
    %671 = vmatprep.subr.bf16.mxu0 0
    %672 = vmatpush2.bf16.msra.mxu0 0
    %673 = vmatprep.subr.bf16.mxu0 0
    %674 = vmatpush2.bf16.msra.mxu0 0
    %675 = vmatprep.subr.bf16.mxu0 0
    %676 = vmatpush2.bf16.msra.mxu0 0
    %677 = vmatprep.subr.bf16.mxu0 0
    %678 = vmatpush2.bf16.msra.mxu0 0
    %679 = vmatprep.subr.bf16.mxu0 0
    %680 = vmatpush2.bf16.msra.mxu0 0
    %681 = vmatprep.subr.bf16.mxu0 0
    %682 = vmatpush2.bf16.msra.mxu0 0
    %683 = vmatprep.mubr.bf16.mxu0 0
    %684 = vmatmul.mubr.bf16.gmra.mxu0 %v596
    %v685 = vpop.f32.mrf.mxu0
    %v686 = vadd.f32 %v601, %v685
    %v687 = vpop.f32.mrf.mxu0
    %v688 = vpop.f32.mrf.mxu0
    %v689 = vpop.f32.mrf.mxu0
    %690 = vdwg.mxu0
    %v691 = vadd.f32 %v431, %v686
    %v692 = vld [vmem:[%s9] sm:$0x1]
    %v693 = vld [vmem:[%s10] sm:$0x1]
    %694 = vadd.xlane.f32.xlu0 %v691
    %v695 = vpop.xlane.xlu0 %694
    %v696 = vmul.f32 %v695, 0.03125
    %v697 = vsub.f32 %v691, %v696
    %v698 = vmul.f32 %v697, %v116
    %v699 = vmul.f32 %v698, %v698
    %700 = vadd.xlane.f32.xlu0 %v699
    %v701 = vpop.xlane.xlu0 %700
    %v702 = vmul.f32 %v701, 0.03125
    %v703 = vadd.f32 %v702, 1e-05
    %v704 = vrsqrt.pop %v703
    %v705 = vmul.f32 %v698, %v704
    %v707 = vlaneseq
    %v708 = vshrl.u32 %v707, 7
    %v709 = vsub.s32 0, %v708
    %v710 = vrot.slane %v692, %v709
    %v712 = vmul.f32 %v705, %v710
    %v714 = vlaneseq
    %v715 = vshrl.u32 %v714, 7
    %v716 = vsub.s32 0, %v715
    %v717 = vrot.slane %v693, %v716
    %v719 = vadd.f32 %v712, %v717
    %v720 = vmax.f32 %v719, 0.0
    %v721 = vpack.c.bf16 %v720, %v720
    %v722 = vld [vmem:[#allocation10] sm:$0xf]
    %v723 = vld [vmem:[#allocation10 + $0x4] sm:$0xf]
    %v724 = vld [vmem:[#allocation10 + $0x8] sm:$0xf]
    %v725 = vld [vmem:[#allocation10 + $0xc] sm:$0xf]
    %v726 = vld [vmem:[#allocation10 + $0x10] sm:$0xf]
    %v727 = vld [vmem:[#allocation10 + $0x14] sm:$0xf]
    %v728 = vld [vmem:[#allocation10 + $0x18] sm:$0xf]
    %v729 = vld [vmem:[#allocation10 + $0x1c] sm:$0xf]
    %v730 = vld [vmem:[#allocation10 + $0x20] sm:$0xf]
    %v731 = vld [vmem:[#allocation10 + $0x24] sm:$0xf]
    %v732 = vld [vmem:[#allocation10 + $0x28] sm:$0xf]
    %v733 = vld [vmem:[#allocation10 + $0x2c] sm:$0xf]
    %v734 = vld [vmem:[#allocation10 + $0x30] sm:$0xf]
    %v735 = vld [vmem:[#allocation10 + $0x34] sm:$0xf]
    %v736 = vld [vmem:[#allocation10 + $0x38] sm:$0xf]
    %v737 = vld [vmem:[#allocation10 + $0x3c] sm:$0xf]
    %v754 = vunpack.c.l.b16 %v722
    %v755 = vunpack.c.l.b16 %v723
    %v756 = vunpack.c.l.b16 %v724
    %v757 = vunpack.c.l.b16 %v725
    %v758 = vunpack.c.l.b16 %v726
    %v759 = vunpack.c.l.b16 %v727
    %v760 = vunpack.c.l.b16 %v728
    %v761 = vunpack.c.l.b16 %v729
    %v762 = vunpack.c.l.b16 %v730
    %v763 = vunpack.c.l.b16 %v731
    %v764 = vunpack.c.l.b16 %v732
    %v765 = vunpack.c.l.b16 %v733
    %v766 = vunpack.c.l.b16 %v734
    %v767 = vunpack.c.l.b16 %v735
    %v768 = vunpack.c.l.b16 %v736
    %v769 = vunpack.c.l.b16 %v737
    %v770 = vpack.c.b16 %v755, %v754
    %v771 = vpack.c.b16 %v757, %v756
    %v772 = vpack.c.b16 %v759, %v758
    %v773 = vpack.c.b16 %v761, %v760
    %v774 = vpack.c.b16 %v763, %v762
    %v775 = vpack.c.b16 %v765, %v764
    %v776 = vpack.c.b16 %v767, %v766
    %v777 = vpack.c.b16 %v769, %v768
    %786 = vmatprep.subr.bf16.mxu0 0
    %787 = vmatpush1.bf16.msra.mxu0 %v777
    %788 = vmatprep.subr.bf16.mxu0 0
    %789 = vmatpush1.bf16.msra.mxu0 %v776
    %790 = vmatprep.subr.bf16.mxu0 0
    %791 = vmatpush1.bf16.msra.mxu0 %v775
    %792 = vmatprep.subr.bf16.mxu0 0
    %793 = vmatpush1.bf16.msra.mxu0 %v774
    %794 = vmatprep.subr.bf16.mxu0 0
    %795 = vmatpush1.bf16.msra.mxu0 %v773
    %796 = vmatprep.subr.bf16.mxu0 0
    %797 = vmatpush1.bf16.msra.mxu0 %v772
    %798 = vmatprep.subr.bf16.mxu0 0
    %799 = vmatpush1.bf16.msra.mxu0 %v771
    %800 = vmatprep.subr.bf16.mxu0 0
    %801 = vmatpush1.bf16.msra.mxu0 %v770
    %802 = vmatprep.subr.bf16.mxu0 0
    %803 = vmatpush2.bf16.msra.mxu0 0
    %804 = vmatprep.subr.bf16.mxu0 0
    %805 = vmatpush2.bf16.msra.mxu0 0
    %806 = vmatprep.subr.bf16.mxu0 0
    %807 = vmatpush2.bf16.msra.mxu0 0
    %808 = vmatprep.subr.bf16.mxu0 0
    %809 = vmatpush2.bf16.msra.mxu0 0
    %810 = vmatprep.subr.bf16.mxu0 0
    %811 = vmatpush2.bf16.msra.mxu0 0
    %812 = vmatprep.subr.bf16.mxu0 0
    %813 = vmatpush2.bf16.msra.mxu0 0
    %814 = vmatprep.subr.bf16.mxu0 0
    %815 = vmatpush2.bf16.msra.mxu0 0
    %816 = vmatprep.subr.bf16.mxu0 0
    %817 = vmatpush2.bf16.msra.mxu0 0
    %818 = vmatprep.mubr.bf16.mxu0 0
    %819 = vmatmul.mubr.bf16.gmra.mxu0 %v721
    %v820 = vpop.f32.mrf.mxu0
    %v821 = vadd.f32 0.0, %v820
    %v822 = vpop.f32.mrf.mxu0
    %v823 = vpop.f32.mrf.mxu0
    %v824 = vpop.f32.mrf.mxu0
    %825 = vdwg.mxu0
    %v826 = vadd.f32 %v720, %v821
    %v827 = vld [vmem:[%s12] sm:$0x1]
    %v829 = vlaneseq
    %v830 = vshrl.u32 %v829, 7
    %v831 = vsub.s32 0, %v830
    %v832 = vrot.slane %v827, %v831
    %v834 = vadd.f32 %v826, %v832
    %835 = vst [vmem:[#allocation11] sm:$0xff] %v834
    // Predicated region
    $region74: #{tpu_custom_call.1} parent=1 // pred_check
      _
    $region75: #{tpu_custom_call.1} parent=1 // pred_check_branch
      %837 = sbr.rel (0) target = $region77
    $region76: #{tpu_custom_call.1} parent=1 // pred_region
      %s839 = ssub.s32 128, 128
      %840 = vsyncadd [#allocation4], %s839
      %s842 = sshll.u32 [#allocation11], 4
      %s843 = int_to_ptr.vmem [resolvable:$true] %s842
      %845 = dma.vmem_to_hbm [thread:$0]  %s843, 128, %s13, [#allocation4]
    $region77: #{tpu_custom_call.1} parent=1 // pred_fallthru
      _
    // Predicated region
    $region78: #{tpu_custom_call.1} parent=1 // pred_check
      _
    $region79: #{tpu_custom_call.1} parent=1 // pred_check_branch
      %847 = sbr.rel (0) target = $region81
    $region80: #{tpu_custom_call.1} parent=1 // pred_region
      %848 = dma.done [#allocation4], 128
    $region81: #{tpu_custom_call.1} parent=1 // pred_fallthru
      _
    %849 = vsyncpa [#allocation3], 1
    %850 = vsyncpa [#allocation6], 1
    %851 = vsyncpa [#allocation9], 1
    %852 = vsyncpa [#allocation4], 1

</llo_original>
